<compile_context>
chip_gen: v7x
topology: tpu7x:2x2x1
jax: 0.10.0
libtpu: 0.0.40
codegen_flags: <defaults>
</compile_context>

<pallas_src>
import numpy as np
import jax
import jax.numpy as jnp
from jax.experimental import pallas as pl
from jax.experimental.pallas import tpu as pltpu

ALPHA = 0.05  # CornerResponseLayer alpha

# 1-D separable taps:
#   Sobel_x = outer([1,2,1], [-1,0,1]),  Sobel_y = outer([-1,0,1], [1,2,1]).
SMOOTH_TAPS = np.array([1.0, 2.0, 1.0], dtype=np.float64)
DIFF_TAPS = np.array([-1.0, 0.0, 1.0], dtype=np.float64)


def _gaussian_taps_1d(ksize: int = 9, sigma: float = 7.0) -> np.ndarray:
    """1-D Gaussian taps; outer(g, g) reproduces get_gaussian_kernel(9, 7)."""
    mu = (ksize - 1) / 2.0
    xs = np.arange(ksize, dtype=np.float64)
    g = np.exp(-((xs - mu) ** 2) / (2.0 * sigma ** 2))
    return g / g.sum()


def _band_matrix(taps: np.ndarray, n: int) -> np.ndarray:
    """Band matrix B with B[i, r] = taps[r - i + pad] (zero outside the band).

    (B @ X)[i, :] == sum_dy taps[dy] * X_zeropad[i + dy - pad, :], i.e. a 1-D
    zero-padded cross-correlation along rows.  X @ _band_matrix(taps, W).T gives
    the same along columns.  This is how zero padding is expressed without any
    padded scratch planes.
    """
    k = taps.shape[0]
    pad = (k - 1) // 2
    b = np.zeros((n, n), dtype=np.float64)
    for i in range(n):
        for r in range(max(0, i - pad), min(n, i + pad + 1)):
            b[i, r] = taps[r - i + pad]
    return b


def harris_response_kernel(img_ref, mh_ref, mw_ref, r_ref):
    """One image per grid step.

    img_ref: (1, H, W) input image.
    mh_ref:  (3, H, H) left band matrices  [sobel-smooth, sobel-diff, gaussian].
    mw_ref:  (3, W, W) right band matrices [sobel-diff, sobel-smooth, gaussian].
    r_ref:   (1, H, W) corner response R.
    """
    img = img_ref[0]

    def dot(a, b):
        return jnp.dot(a, b, preferred_element_type=jnp.float32)

    # ImageGradientsLayer: separable 3x3 Sobel cross-correlation (zero pad 1) on MXU.
    ix = dot(dot(mh_ref[0], img), mw_ref[0])
    iy = dot(dot(mh_ref[1], img), mw_ref[1])

    # ChannelProductLayer: Ixx, Iyy, Ixy (kept live; no stack/store/reload).
    ixx = ix * ix
    iyy = iy * iy
    ixy = ix * iy

    # SecondMomentMatrixLayer: separable 9x9 Gaussian (zero pad 4) on MXU.
    gh = mh_ref[2]
    gw = mw_ref[2]
    sxx = dot(dot(gh, ixx), gw)
    syy = dot(dot(gh, iyy), gw)
    sxy = dot(dot(gh, ixy), gw)

    # CornerResponseLayer: R = det(M) - alpha * trace(M)^2.
    det = sxx * syy - sxy * sxy
    trace = sxx + syy
    r_ref[0] = det - ALPHA * (trace * trace)


def nms_kernel(r_ref, med_ref, o_ref, pad_ref):
    """One image per grid step.

    r_ref:   (1, H, W) corner response.
    med_ref: (1,) SMEM scalar -- global (lower) median of R over the whole batch.
    o_ref:   (1, H, W) output.
    pad_ref: VMEM (H + 6, W + 6) -inf padded plane for the 7x7 max-pool.
    """
    H, W = r_ref.shape[1], r_ref.shape[2]
    r = r_ref[0]

    # Threshold (strict >, like torch.where(x > torch.median(x), x, 0)).
    thr = jnp.where(r > med_ref[0], r, 0.0)

    pad_ref[...] = jnp.full((H + 6, W + 6), -jnp.inf, dtype=jnp.float32)
    pad_ref[3:3 + H, 3:3 + W] = thr
    pm = pad_ref[...]

    # Separable 7x7 max-pool (stride 1, implicit -inf padding 3): 7 + 7 taps.
    bv = pm[0:H, :]
    for dy in range(1, 7):
        bv = jnp.maximum(bv, pm[dy:dy + H, :])
    b = bv[:, 0:W]
    for dx in range(1, 7):
        b = jnp.maximum(b, bv[:, dx:dx + W])

    # Keep only locations equal to their 7x7 local max.
    o_ref[0] = jnp.where(thr == b, thr, 0.0)


@jax.jit
def harris_net_forward(x: jax.Array) -> jax.Array:
    """x: (N, 1, H, W) float32 (NCHW, single channel). Returns (N, 1, H, W)."""
    N, C, H, W = x.shape
    assert C == 1, "HarrisNet takes single-channel images"
    img = x.reshape(N, H, W).astype(jnp.float32)

    gauss = _gaussian_taps_1d(9, 7.0)
    mats_h = jnp.asarray(np.stack([
        _band_matrix(SMOOTH_TAPS, H),
        _band_matrix(DIFF_TAPS, H),
        _band_matrix(gauss, H),
    ]).astype(np.float32))
    mats_w = jnp.asarray(np.stack([
        _band_matrix(DIFF_TAPS, W).T,
        _band_matrix(SMOOTH_TAPS, W).T,
        _band_matrix(gauss, W).T,
    ]).astype(np.float32))

    cparams = pltpu.CompilerParams(
        dimension_semantics=("parallel",),
        vmem_limit_bytes=32 * 1024 * 1024,
    )

    r = pl.pallas_call(
        harris_response_kernel,
        grid=(N,),
        in_specs=[
            pl.BlockSpec((1, H, W), lambda n: (n, 0, 0)),
            pl.BlockSpec((3, H, H), lambda n: (0, 0, 0)),
            pl.BlockSpec((3, W, W), lambda n: (0, 0, 0)),
        ],
        out_specs=pl.BlockSpec((1, H, W), lambda n: (n, 0, 0)),
        out_shape=jax.ShapeDtypeStruct((N, H, W), jnp.float32),
        compiler_params=cparams,
    )(img, mats_h, mats_w)

    # torch.median over the full flattened tensor returns the LOWER of the two
    # middle values for an even count -> sorted index (n - 1) // 2.
    # TODO(synk): for large images replace the O(n log n) sort with an O(n)
    # device-side histogram/counting selection kernel.
    flat = r.reshape(-1)
    med = jnp.sort(flat)[(flat.size - 1) // 2].reshape(1)

    out = pl.pallas_call(
        nms_kernel,
        grid=(N,),
        in_specs=[
            pl.BlockSpec((1, H, W), lambda n: (n, 0, 0)),
            pl.BlockSpec(memory_space=pltpu.MemorySpace.SMEM),
        ],
        out_specs=pl.BlockSpec((1, H, W), lambda n: (n, 0, 0)),
        out_shape=jax.ShapeDtypeStruct((N, H, W), jnp.float32),
        scratch_shapes=[pltpu.VMEM((H + 6, W + 6), jnp.float32)],
        compiler_params=cparams,
    )(r, med)

    return out.reshape(N, 1, H, W)


if __name__ == "__main__":
    key = jax.random.PRNGKey(0)
    x = jax.random.normal(key, (2, 1, 16, 16), dtype=jnp.float32)
    out = harris_net_forward(x)
    out = jax.block_until_ready(out)
    assert out.shape == (2, 1, 16, 16)
    assert out.dtype == jnp.float32
    print("KERNEL_OK")
</pallas_src>

<mosaic_0001>
module attributes {stable_mosaic.version = 11 : i64} {
  func.func @harris_response_kernel(%arg0: i32, %arg1: memref<1x16x16xf32, #tpu.memory_space<vmem>>, %arg2: memref<3x16x16xf32, #tpu.memory_space<vmem>>, %arg3: memref<3x16x16xf32, #tpu.memory_space<vmem>>, %arg4: memref<1x16x16xf32, #tpu.memory_space<vmem>>) attributes {dimension_semantics = [#tpu.dimension_semantics<parallel>], iteration_bounds = array<i64: 2>, scalar_prefetch = 0 : i64, scratch_operands = 0 : i64, tpu.core_type = #tpu.core_type<tc>, window_params = [{transform_indices = @transform_0, window_bounds = array<i64: 1, 16, 16>}, {pipeline_mode = #tpu.pipeline_mode<synchronous>, transform_indices = @transform_1, window_bounds = array<i64: 3, 16, 16>}, {pipeline_mode = #tpu.pipeline_mode<synchronous>, transform_indices = @transform_2, window_bounds = array<i64: 3, 16, 16>}, {transform_indices = @transform_3, window_bounds = array<i64: 1, 16, 16>}]} {
    %c0 = arith.constant 0 : index
    %c0_0 = arith.constant 0 : index
    %c0_1 = arith.constant 0 : index
    %0 = vector.load %arg1[%c0, %c0_0, %c0_1] : memref<1x16x16xf32, #tpu.memory_space<vmem>>, vector<1x16x16xf32>
    %1 = vector.shape_cast %0 : vector<1x16x16xf32> to vector<16x16xf32>
    %c0_2 = arith.constant 0 : index
    %c0_3 = arith.constant 0 : index
    %c0_4 = arith.constant 0 : index
    %2 = vector.load %arg2[%c0_2, %c0_3, %c0_4] : memref<3x16x16xf32, #tpu.memory_space<vmem>>, vector<1x16x16xf32>
    %3 = vector.shape_cast %2 : vector<1x16x16xf32> to vector<16x16xf32>
    %cst = arith.constant dense<0.000000e+00> : vector<16x16xf32>
    %4 = tpu.matmul %3, %1, %cst {dimension_numbers = #tpu.dot_dimension_numbers<[1], [0], [0], [1], [0, 0, 1, 1], [], []>} : vector<16x16xf32>, vector<16x16xf32>, vector<16x16xf32> -> vector<16x16xf32>
    %c0_5 = arith.constant 0 : index
    %c0_6 = arith.constant 0 : index
    %c0_7 = arith.constant 0 : index
    %5 = vector.load %arg3[%c0_5, %c0_6, %c0_7] : memref<3x16x16xf32, #tpu.memory_space<vmem>>, vector<1x16x16xf32>
    %6 = vector.shape_cast %5 : vector<1x16x16xf32> to vector<16x16xf32>
    %cst_8 = arith.constant dense<0.000000e+00> : vector<16x16xf32>
    %7 = tpu.matmul %4, %6, %cst_8 {dimension_numbers = #tpu.dot_dimension_numbers<[1], [0], [0], [1], [0, 0, 1, 1], [], []>} : vector<16x16xf32>, vector<16x16xf32>, vector<16x16xf32> -> vector<16x16xf32>
    %c1 = arith.constant 1 : index
    %c0_9 = arith.constant 0 : index
    %c0_10 = arith.constant 0 : index
    %8 = vector.load %arg2[%c1, %c0_9, %c0_10] : memref<3x16x16xf32, #tpu.memory_space<vmem>>, vector<1x16x16xf32>
    %9 = vector.shape_cast %8 : vector<1x16x16xf32> to vector<16x16xf32>
    %cst_11 = arith.constant dense<0.000000e+00> : vector<16x16xf32>
    %10 = tpu.matmul %9, %1, %cst_11 {dimension_numbers = #tpu.dot_dimension_numbers<[1], [0], [0], [1], [0, 0, 1, 1], [], []>} : vector<16x16xf32>, vector<16x16xf32>, vector<16x16xf32> -> vector<16x16xf32>
    %c1_12 = arith.constant 1 : index
    %c0_13 = arith.constant 0 : index
    %c0_14 = arith.constant 0 : index
    %11 = vector.load %arg3[%c1_12, %c0_13, %c0_14] : memref<3x16x16xf32, #tpu.memory_space<vmem>>, vector<1x16x16xf32>
    %12 = vector.shape_cast %11 : vector<1x16x16xf32> to vector<16x16xf32>
    %cst_15 = arith.constant dense<0.000000e+00> : vector<16x16xf32>
    %13 = tpu.matmul %10, %12, %cst_15 {dimension_numbers = #tpu.dot_dimension_numbers<[1], [0], [0], [1], [0, 0, 1, 1], [], []>} : vector<16x16xf32>, vector<16x16xf32>, vector<16x16xf32> -> vector<16x16xf32>
    %14 = arith.mulf %7, %7 : vector<16x16xf32>
    %15 = arith.mulf %13, %13 : vector<16x16xf32>
    %16 = arith.mulf %7, %13 : vector<16x16xf32>
    %c2 = arith.constant 2 : index
    %c0_16 = arith.constant 0 : index
    %c0_17 = arith.constant 0 : index
    %17 = vector.load %arg2[%c2, %c0_16, %c0_17] : memref<3x16x16xf32, #tpu.memory_space<vmem>>, vector<1x16x16xf32>
    %18 = vector.shape_cast %17 : vector<1x16x16xf32> to vector<16x16xf32>
    %c2_18 = arith.constant 2 : index
    %c0_19 = arith.constant 0 : index
    %c0_20 = arith.constant 0 : index
    %19 = vector.load %arg3[%c2_18, %c0_19, %c0_20] : memref<3x16x16xf32, #tpu.memory_space<vmem>>, vector<1x16x16xf32>
    %20 = vector.shape_cast %19 : vector<1x16x16xf32> to vector<16x16xf32>
    %cst_21 = arith.constant dense<0.000000e+00> : vector<16x16xf32>
    %21 = tpu.matmul %18, %14, %cst_21 {dimension_numbers = #tpu.dot_dimension_numbers<[1], [0], [0], [1], [0, 0, 1, 1], [], []>} : vector<16x16xf32>, vector<16x16xf32>, vector<16x16xf32> -> vector<16x16xf32>
    %cst_22 = arith.constant dense<0.000000e+00> : vector<16x16xf32>
    %22 = tpu.matmul %21, %20, %cst_22 {dimension_numbers = #tpu.dot_dimension_numbers<[1], [0], [0], [1], [0, 0, 1, 1], [], []>} : vector<16x16xf32>, vector<16x16xf32>, vector<16x16xf32> -> vector<16x16xf32>
    %cst_23 = arith.constant dense<0.000000e+00> : vector<16x16xf32>
    %23 = tpu.matmul %18, %15, %cst_23 {dimension_numbers = #tpu.dot_dimension_numbers<[1], [0], [0], [1], [0, 0, 1, 1], [], []>} : vector<16x16xf32>, vector<16x16xf32>, vector<16x16xf32> -> vector<16x16xf32>
    %cst_24 = arith.constant dense<0.000000e+00> : vector<16x16xf32>
    %24 = tpu.matmul %23, %20, %cst_24 {dimension_numbers = #tpu.dot_dimension_numbers<[1], [0], [0], [1], [0, 0, 1, 1], [], []>} : vector<16x16xf32>, vector<16x16xf32>, vector<16x16xf32> -> vector<16x16xf32>
    %cst_25 = arith.constant dense<0.000000e+00> : vector<16x16xf32>
    %25 = tpu.matmul %18, %16, %cst_25 {dimension_numbers = #tpu.dot_dimension_numbers<[1], [0], [0], [1], [0, 0, 1, 1], [], []>} : vector<16x16xf32>, vector<16x16xf32>, vector<16x16xf32> -> vector<16x16xf32>
    %cst_26 = arith.constant dense<0.000000e+00> : vector<16x16xf32>
    %26 = tpu.matmul %25, %20, %cst_26 {dimension_numbers = #tpu.dot_dimension_numbers<[1], [0], [0], [1], [0, 0, 1, 1], [], []>} : vector<16x16xf32>, vector<16x16xf32>, vector<16x16xf32> -> vector<16x16xf32>
    %27 = arith.mulf %22, %24 : vector<16x16xf32>
    %28 = arith.mulf %26, %26 : vector<16x16xf32>
    %29 = arith.subf %27, %28 : vector<16x16xf32>
    %30 = arith.addf %22, %24 : vector<16x16xf32>
    %31 = arith.mulf %30, %30 : vector<16x16xf32>
    %cst_27 = arith.constant 5.000000e-02 : f32
    %32 = vector.broadcast %cst_27 : f32 to vector<16x16xf32>
    %33 = arith.mulf %32, %31 : vector<16x16xf32>
    %34 = arith.subf %29, %33 : vector<16x16xf32>
    %c0_28 = arith.constant 0 : index
    %c0_29 = arith.constant 0 : index
    %c0_30 = arith.constant 0 : index
    %35 = vector.load %arg4[%c0_28, %c0_29, %c0_30] : memref<1x16x16xf32, #tpu.memory_space<vmem>>, vector<1x16x16xf32>
    %36 = vector.shape_cast %35 : vector<1x16x16xf32> to vector<16x16xf32>
    %37 = vector.shape_cast %34 : vector<16x16xf32> to vector<1x16x16xf32>
    tpu.vector_store %arg4[%c0_28, %c0_29, %c0_30], %37 {strides = array<i32>} : memref<1x16x16xf32, #tpu.memory_space<vmem>>, vector<1x16x16xf32>,
    return
  }
  func.func @transform_0(%arg0: i32) -> (i32, i32, i32) {
    %c0_i32 = arith.constant 0 : i32
    %c0_i32_0 = arith.constant 0 : i32
    %c0_i32_1 = arith.constant 0 : i32
    return %arg0, %c0_i32, %c0_i32_0 : i32, i32, i32
  }
  func.func @transform_1(%arg0: i32) -> (i32, i32, i32) {
    %c0_i32 = arith.constant 0 : i32
    %c0_i32_0 = arith.constant 0 : i32
    %c0_i32_1 = arith.constant 0 : i32
    %c0_i32_2 = arith.constant 0 : i32
    return %c0_i32, %c0_i32_0, %c0_i32_1 : i32, i32, i32
  }
  func.func @transform_2(%arg0: i32) -> (i32, i32, i32) {
    %c0_i32 = arith.constant 0 : i32
    %c0_i32_0 = arith.constant 0 : i32
    %c0_i32_1 = arith.constant 0 : i32
    %c0_i32_2 = arith.constant 0 : i32
    return %c0_i32, %c0_i32_0, %c0_i32_1 : i32, i32, i32
  }
  func.func @transform_3(%arg0: i32) -> (i32, i32, i32) {
    %c0_i32 = arith.constant 0 : i32
    %c0_i32_0 = arith.constant 0 : i32
    %c0_i32_1 = arith.constant 0 : i32
    return %arg0, %c0_i32, %c0_i32_0 : i32, i32, i32
  }
}

module attributes {stable_mosaic.version = 11 : i64} {
  func.func @nms_kernel(%arg0: i32, %arg1: memref<1x16x16xf32, #tpu.memory_space<vmem>>, %arg2: memref<1xf32, #tpu.memory_space<smem>>, %arg3: memref<1x16x16xf32, #tpu.memory_space<vmem>>, %arg4: memref<22x22xf32, #tpu.memory_space<vmem>>) attributes {dimension_semantics = [#tpu.dimension_semantics<parallel>], iteration_bounds = array<i64: 2>, scalar_prefetch = 0 : i64, scratch_operands = 1 : i64, tpu.core_type = #tpu.core_type<tc>, window_params = [{transform_indices = @transform_0, window_bounds = array<i64: 1, 16, 16>}, {transform_indices = @transform_1, window_bounds = array<i64: 1>}, {transform_indices = @transform_2, window_bounds = array<i64: 1, 16, 16>}]} {
    %c0 = arith.constant 0 : index
    %c0_0 = arith.constant 0 : index
    %c0_1 = arith.constant 0 : index
    %0 = vector.load %arg1[%c0, %c0_0, %c0_1] : memref<1x16x16xf32, #tpu.memory_space<vmem>>, vector<1x16x16xf32>
    %1 = vector.shape_cast %0 : vector<1x16x16xf32> to vector<16x16xf32>
    %c0_2 = arith.constant 0 : index
    %2 = memref.load %arg2[%c0_2] : memref<1xf32, #tpu.memory_space<smem>>
    %3 = vector.broadcast %2 : f32 to vector<16x16xf32>
    %4 = arith.cmpf ogt, %1, %3 : vector<16x16xf32>
    %cst = arith.constant 0.000000e+00 : f32
    %5 = vector.broadcast %cst : f32 to vector<16x16xf32>
    %6 = arith.select %4, %1, %5 : vector<16x16xi1>, vector<16x16xf32>
    %cst_3 = arith.constant 0xFF800000 : f32
    %7 = vector.broadcast %cst_3 : f32 to vector<22x22xf32>
    %c0_4 = arith.constant 0 : index
    %c0_5 = arith.constant 0 : index
    %8 = vector.load %arg4[%c0_4, %c0_5] : memref<22x22xf32, #tpu.memory_space<vmem>>, vector<22x22xf32>
    tpu.vector_store %arg4[%c0_4, %c0_5], %7 {strides = array<i32>} : memref<22x22xf32, #tpu.memory_space<vmem>>, vector<22x22xf32>,
    %c3 = arith.constant 3 : index
    %c3_6 = arith.constant 3 : index
    %9 = vector.load %arg4[%c3, %c3_6] : memref<22x22xf32, #tpu.memory_space<vmem>>, vector<16x16xf32>
    tpu.vector_store %arg4[%c3, %c3_6], %6 {strides = array<i32>} : memref<22x22xf32, #tpu.memory_space<vmem>>, vector<16x16xf32>,
    %c0_7 = arith.constant 0 : index
    %c0_8 = arith.constant 0 : index
    %10 = vector.load %arg4[%c0_7, %c0_8] : memref<22x22xf32, #tpu.memory_space<vmem>>, vector<22x22xf32>
    %11 = vector.extract_strided_slice %10 {offsets = [0, 0], sizes = [16, 22], strides = [1, 1]} : vector<22x22xf32> to vector<16x22xf32>
    %12 = vector.extract_strided_slice %10 {offsets = [1, 0], sizes = [16, 22], strides = [1, 1]} : vector<22x22xf32> to vector<16x22xf32>
    %13 = arith.maximumf %11, %12 : vector<16x22xf32>
    %14 = vector.extract_strided_slice %10 {offsets = [2, 0], sizes = [16, 22], strides = [1, 1]} : vector<22x22xf32> to vector<16x22xf32>
    %15 = arith.maximumf %13, %14 : vector<16x22xf32>
    %16 = vector.extract_strided_slice %10 {offsets = [3, 0], sizes = [16, 22], strides = [1, 1]} : vector<22x22xf32> to vector<16x22xf32>
    %17 = arith.maximumf %15, %16 : vector<16x22xf32>
    %18 = vector.extract_strided_slice %10 {offsets = [4, 0], sizes = [16, 22], strides = [1, 1]} : vector<22x22xf32> to vector<16x22xf32>
    %19 = arith.maximumf %17, %18 : vector<16x22xf32>
    %20 = vector.extract_strided_slice %10 {offsets = [5, 0], sizes = [16, 22], strides = [1, 1]} : vector<22x22xf32> to vector<16x22xf32>
    %21 = arith.maximumf %19, %20 : vector<16x22xf32>
    %22 = vector.extract_strided_slice %10 {offsets = [6, 0], sizes = [16, 22], strides = [1, 1]} : vector<22x22xf32> to vector<16x22xf32>
    %23 = arith.maximumf %21, %22 : vector<16x22xf32>
    %24 = vector.extract_strided_slice %23 {offsets = [0, 0], sizes = [16, 16], strides = [1, 1]} : vector<16x22xf32> to vector<16x16xf32>
    %25 = vector.extract_strided_slice %23 {offsets = [0, 1], sizes = [16, 16], strides = [1, 1]} : vector<16x22xf32> to vector<16x16xf32>
    %26 = arith.maximumf %24, %25 : vector<16x16xf32>
    %27 = vector.extract_strided_slice %23 {offsets = [0, 2], sizes = [16, 16], strides = [1, 1]} : vector<16x22xf32> to vector<16x16xf32>
    %28 = arith.maximumf %26, %27 : vector<16x16xf32>
    %29 = vector.extract_strided_slice %23 {offsets = [0, 3], sizes = [16, 16], strides = [1, 1]} : vector<16x22xf32> to vector<16x16xf32>
    %30 = arith.maximumf %28, %29 : vector<16x16xf32>
    %31 = vector.extract_strided_slice %23 {offsets = [0, 4], sizes = [16, 16], strides = [1, 1]} : vector<16x22xf32> to vector<16x16xf32>
    %32 = arith.maximumf %30, %31 : vector<16x16xf32>
    %33 = vector.extract_strided_slice %23 {offsets = [0, 5], sizes = [16, 16], strides = [1, 1]} : vector<16x22xf32> to vector<16x16xf32>
    %34 = arith.maximumf %32, %33 : vector<16x16xf32>
    %35 = vector.extract_strided_slice %23 {offsets = [0, 6], sizes = [16, 16], strides = [1, 1]} : vector<16x22xf32> to vector<16x16xf32>
    %36 = arith.maximumf %34, %35 : vector<16x16xf32>
    %37 = arith.cmpf oeq, %6, %36 : vector<16x16xf32>
    %cst_9 = arith.constant 0.000000e+00 : f32
    %38 = vector.broadcast %cst_9 : f32 to vector<16x16xf32>
    %39 = arith.select %37, %6, %38 : vector<16x16xi1>, vector<16x16xf32>
    %c0_10 = arith.constant 0 : index
    %c0_11 = arith.constant 0 : index
    %c0_12 = arith.constant 0 : index
    %40 = vector.load %arg3[%c0_10, %c0_11, %c0_12] : memref<1x16x16xf32, #tpu.memory_space<vmem>>, vector<1x16x16xf32>
    %41 = vector.shape_cast %40 : vector<1x16x16xf32> to vector<16x16xf32>
    %42 = vector.shape_cast %39 : vector<16x16xf32> to vector<1x16x16xf32>
    tpu.vector_store %arg3[%c0_10, %c0_11, %c0_12], %42 {strides = array<i32>} : memref<1x16x16xf32, #tpu.memory_space<vmem>>, vector<1x16x16xf32>,
    return
  }
  func.func @transform_0(%arg0: i32) -> (i32, i32, i32) {
    %c0_i32 = arith.constant 0 : i32
    %c0_i32_0 = arith.constant 0 : i32
    %c0_i32_1 = arith.constant 0 : i32
    return %arg0, %c0_i32, %c0_i32_0 : i32, i32, i32
  }
  func.func @transform_1(%arg0: i32) -> i32 {
    %c0_i32 = arith.constant 0 : i32
    %c0_i32_0 = arith.constant 0 : i32
    return %c0_i32 : i32
  }
  func.func @transform_2(%arg0: i32) -> (i32, i32, i32) {
    %c0_i32 = arith.constant 0 : i32
    %c0_i32_0 = arith.constant 0 : i32
    %c0_i32_1 = arith.constant 0 : i32
    return %arg0, %c0_i32, %c0_i32_0 : i32, i32, i32
  }
}

</mosaic_0001>

<llo_original>
// kernel: harris_net_forward.3
$region0: #{harris_net_forward.3}
  #allocation0 [shape = 'u32[]', space=smem, size = 0x4, offset = 0x4, fixed_abs, tag = 'smem constant byte address 0x4 - core index']
  #allocation1 [shape = 'u32[144,128]{1,0:T(1,128)}', space=vmem, size = 0x12000, scoped, tag = 'internal scratch']
  #allocation2 [shape = 'f32[22,22]{1,0:T(8,128)}', space=vmem, size = 0x3000, scoped, tag = 'scratch operand']
  #allocation3 [shape = 'f32[1]{0:T(128)S(6)}', space=smem, size = 0x200, scoped, tag = 'scoped memory for harris_net_forward.3']
  %s0 = inlined_call_operand.vmem [shape: f32[2,16,16], index: 0, kind: input, shape index: {}]
  %s1 = inlined_call_operand.<no memory space> [shape: f32[1], index: 1, kind: input, shape index: {}]
  %s2 = inlined_call_operand.hbm [shape: f32[2,16,16], index: 2, kind: output, shape index: {}]
  %s3 = sld [smem:[#allocation0]]
  $region41: #{harris_net_forward.3} parent=0
    _
  %s5 = ssub.s32 1, %s3
  %s6 = scalar_select 0, %s5, %s3
  %7 = sst [smem:[#allocation3]] %s1
  $region1: #{harris_net_forward.3} parent=0
    #allocation4 [shape = 'u8[16384]{0}', space=vmem, size = 0x4000, scoped, tag = 'output window, operand 0']
    #allocation5 [shape = 's32[2]{0}', space=sflag, size = 0x8, scoped, tag = 'scoped memory for harris_net_forward.3']
    %8 = vsyncpa [#allocation5], 0
    %s9 = scalar_lea.sflag [#allocation5], 1
    %10 = vsyncpa %s9, 0
    loop: start=0, step=1, limit=4
    $region2: #{harris_net_forward.3} parent=1 // loop_pre_header
      _
    $region3: #{harris_net_forward.3} parent=1 // loop_header
      %s12 = sphi 0, %s16
      %p13 = scmp.ge.s32.totalorder %s12, 4
      %s22 = sphi 0, %s24
      %s25 = sphi 0, %s22
      %s26 = sphi 0, %s25
      %s42 = sphi 0, %s26
      %s46 = sphi 0, %s46
      %s48 = sphi 0, %s46
      %s49 = sphi 0, %s48
      %s63 = sphi 0, %s49
      %s69 = sphi 0, %s71
      %s72 = sphi 0, %s69
      %s73 = sphi 0, %s72
      %s89 = sphi 0, %s73
    $region4: #{harris_net_forward.3} parent=1 // loop_header_branch
      %15 = sbr.rel (%p13) target = $region8
    $region5: #{harris_net_forward.3} parent=1 // loop_body
      %s17 = ssub.s32 %s12, 1
      %s18 = ssub.s32 %s12, 2
      %s19 = sadd.s32 %s12, 1
      %s20 = ssub.s32 %s12, %s19
      %p21 = scmp.eq.s32.totalorder %s20, 0
      %s23 = sadd.s32 %s22, 1
      %s24 = scalar_select %p21, %s22, %s23
      %p27 = pneg %p21
      %p28 = scmp.eq.s32.totalorder %s12, 1
      %p29 = por %p27, %p28
      %p30 = scmp.ne.s32.totalorder %s22, %s25
      %p31 = scmp.eq.s32.totalorder %s12, 0
      %p32 = por %p30, %p31
      %p33 = scmp.ne.s32.totalorder %s22, %s25
      %p34 = scmp.eq.s32.totalorder %s17, 1
      %p35 = por %p33, %p34
      %p36 = scmp.ne.s32.totalorder %s25, %s26
      %p37 = scmp.eq.s32.totalorder %s17, 0
      %p38 = por %p36, %p37
      %p39 = scmp.ne.s32.totalorder %s25, %s26
      %p40 = scmp.eq.s32.totalorder %s18, 1
      %p41 = por %p39, %p40
      %p43 = scmp.ne.s32.totalorder %s26, %s42
      %p44 = scmp.eq.s32.totalorder %s18, 0
      %p45 = por %p43, %p44
      %s47 = sadd.s32 %s46, 1
      %p50 = scmp.eq.s32.totalorder %s12, 1
      %p51 = scmp.ne.s32.totalorder %s46, %s48
      %p52 = scmp.eq.s32.totalorder %s12, 0
      %p53 = por %p51, %p52
      %p54 = scmp.ne.s32.totalorder %s46, %s48
      %p55 = scmp.eq.s32.totalorder %s17, 1
      %p56 = por %p54, %p55
      %p57 = scmp.ne.s32.totalorder %s48, %s49
      %p58 = scmp.eq.s32.totalorder %s17, 0
      %p59 = por %p57, %p58
      %p60 = scmp.ne.s32.totalorder %s48, %s49
      %p61 = scmp.eq.s32.totalorder %s18, 1
      %p62 = por %p60, %p61
      %p64 = scmp.ne.s32.totalorder %s49, %s63
      %p65 = scmp.eq.s32.totalorder %s18, 0
      %p66 = por %p64, %p65
      %s67 = ssub.s32 %s12, %s19
      %p68 = scmp.eq.s32.totalorder %s67, 0
      %s70 = sadd.s32 %s69, 1
      %s71 = scalar_select %p68, %s69, %s70
      %p74 = pneg %p68
      %p75 = scmp.eq.s32.totalorder %s12, 1
      %p76 = por %p74, %p75
      %p77 = scmp.ne.s32.totalorder %s69, %s72
      %p78 = scmp.eq.s32.totalorder %s12, 0
      %p79 = por %p77, %p78
      %p80 = scmp.ne.s32.totalorder %s69, %s72
      %p81 = scmp.eq.s32.totalorder %s17, 1
      %p82 = por %p80, %p81
      %p83 = scmp.ne.s32.totalorder %s72, %s73
      %p84 = scmp.eq.s32.totalorder %s17, 0
      %p85 = por %p83, %p84
      %p86 = scmp.ne.s32.totalorder %s72, %s73
      %p87 = scmp.eq.s32.totalorder %s18, 1
      %p88 = por %p86, %p87
      %p90 = scmp.ne.s32.totalorder %s73, %s89
      %p91 = scmp.eq.s32.totalorder %s18, 0
      %p92 = por %p90, %p91
      %p93 = scmp.le.s32.totalorder 1, %s12
      %p94 = scmp.lt.s32.totalorder %s12, 3
      %p95 = pnand %p93, %p94
      %p96 = pneg %p95
      // Predicated region
      $region9: #{harris_net_forward.3} parent=5 // pred_check
        _
      $region10: #{harris_net_forward.3} parent=5 // pred_check_branch
        %98 = sbr.rel (%p95) target = $region12
      $region11: #{harris_net_forward.3} parent=5 // pred_region
        %s99 = ssub.s32 %s12, 1
        // Predicated region
        $region13: #{harris_net_forward.3} parent=11 // pred_check
          %p100 = pneg %p59
        $region14: #{harris_net_forward.3} parent=11 // pred_check_branch
          %102 = sbr.rel (%p100) target = $region16
        $region15: #{harris_net_forward.3} parent=11 // pred_region
          _
        $region16: #{harris_net_forward.3} parent=11 // pred_fallthru
          _
      $region12: #{harris_net_forward.3} parent=5 // pred_fallthru
        _
      %p103 = scmp.lt.s32.totalorder %s12, 2
      // Predicated region
      $region17: #{harris_net_forward.3} parent=5 // pred_check
        %p104 = pneg %p103
      $region18: #{harris_net_forward.3} parent=5 // pred_check_branch
        %106 = sbr.rel (%p104) target = $region20
      $region19: #{harris_net_forward.3} parent=5 // pred_region
        // Predicated region
        $region21: #{harris_net_forward.3} parent=19 // pred_check
          %p107 = pneg %p32
        $region22: #{harris_net_forward.3} parent=19 // pred_check_branch
          %109 = sbr.rel (%p107) target = $region24
        $region23: #{harris_net_forward.3} parent=19 // pred_region
          %p110 = scmp.lt.s32.totalorder %s12, 1
          %s111 = scalar_select %p110, %s12, 1
          %s112 = smul.addr %s111, 2
          %s113 = smul.addr %s112, 8
          %s114 = scalar_lea.vmem %s0, %s113
        $region24: #{harris_net_forward.3} parent=19 // pred_fallthru
          _
      $region20: #{harris_net_forward.3} parent=5 // pred_fallthru
        _
      %p115 = scmp.le.s32.totalorder 1, %s12
      %p116 = scmp.lt.s32.totalorder %s12, 3
      %p117 = pnand %p115, %p116
      %p118 = pneg %p117
      // Predicated region
      $region25: #{harris_net_forward.3} parent=5 // pred_check
        _
      $region26: #{harris_net_forward.3} parent=5 // pred_check_branch
        %120 = sbr.rel (%p117) target = $region28
      $region27: #{harris_net_forward.3} parent=5 // pred_region
        %s121 = ssub.s32 %s12, 1
        %p122 = scmp.lt.s32.totalorder %s17, 1
        %s123 = scalar_select %p122, %s17, 1
        %s124 = smul.addr %s123, 2
        %s125 = smul.addr %s124, 8
        %s126 = scalar_lea.vmem %s0, %s125
        %p127 = pneg %p38
        %p128 = pneg %p35
        %p129 = pneg %p59
        %p130 = pneg %p56
        %p131 = pneg %p85
        %p132 = pneg %p82
        %s133 = sand.u32 %s72, 1
        %s134 = scalar_lea.sflag [#allocation5], %s133
        %s135 = sand.u32 %s72, 1
        %s136 = smul.addr %s135, 16
        %s137 = scalar_lea.vmem [#allocation4], %s136
        %p138 = scmp.lt.s32.totalorder %s17, 1
        %s139 = scalar_select %p138, %s17, 1
        %s140 = smul.addr %s139, 2
        %s141 = smul.addr %s140, 8
        %s142 = scalar_lea.vmem %s0, %s141
        %v143 = vld [vmem:[%s142] sm:$0xff]
        %v144 = vld [vmem:[%s142 + $0x8] sm:$0xff]
        %s145 = sld [smem:[#allocation3]]
        %v146 = vstv %s145
        %vm147 = vcmp.gt.f32.partialorder %v143, %v146
        %vm148 = vcmp.gt.f32.partialorder %v144, %v146
        %v149 = vsel %vm147, %v143, 0.0
        %v150 = vsel %vm148, %v144, 0.0
        %vm151 = vcmask 179200
        %152 = vst.msk [vmem:[#allocation2] sm:$0xff] %vm151, -inf
        %153 = vst.msk [vmem:[#allocation2 + $0x8] sm:$0xff] %vm151, -inf
        %vm154 = vcmask 177152
        %155 = vst.msk [vmem:[#allocation2 + $0x10] sm:$0x3f] %vm154, -inf
        %158 = vrot.lane.b32.xlu0 %v149, 3
        %v159 = vpop.permute.xlu0 %158
        %160 = vrot.lane.b32.xlu0 %v150, 3
        %v161 = vpop.permute.xlu0 %160
        %vm164 = vcmask 154648
        %165 = vst.msk [vmem:[#allocation2 + $0x3] sm:$0xff] %vm164, %v159
        %166 = vst.msk [vmem:[#allocation2 + $0xb] sm:$0xff] %vm164, %v161
        %v167 = vld [vmem:[#allocation2] sm:$0xff]
        %v168 = vld [vmem:[#allocation2 + $0x8] sm:$0xff]
        %v169 = vld [vmem:[#allocation2 + $0x10] sm:$0x3f]
        %vm173 = vcmask 1046528
        %v174 = vrot.slane %v167, 1
        %v175 = vrot.slane %v168, 1
        %v176 = vsel %vm173, %v174, %v175
        %v177 = vrot.slane %v169, 1
        %v178 = vsel %vm173, %v175, %v177
        %v181 = vmax.f32 %v167, %v176
        %v182 = vmax.f32 %v168, %v178
        %vm183 = vcmask 1045504
        %v184 = vrot.slane %v167, 2
        %v185 = vrot.slane %v168, 2
        %v186 = vsel %vm183, %v184, %v185
        %v187 = vrot.slane %v169, 2
        %v188 = vsel %vm183, %v185, %v187
        %v191 = vmax.f32 %v181, %v186
        %v192 = vmax.f32 %v182, %v188
        %vm193 = vcmask 1044480
        %v194 = vrot.slane %v167, 3
        %v195 = vrot.slane %v168, 3
        %v196 = vsel %vm193, %v194, %v195
        %v197 = vrot.slane %v169, 3
        %v198 = vsel %vm193, %v195, %v197
        %v201 = vmax.f32 %v191, %v196
        %v202 = vmax.f32 %v192, %v198
        %vm203 = vcmask 1043456
        %v204 = vrot.slane %v167, 4
        %v205 = vrot.slane %v168, 4
        %v206 = vsel %vm203, %v204, %v205
        %v207 = vrot.slane %v169, 4
        %v208 = vsel %vm203, %v205, %v207
        %v211 = vmax.f32 %v201, %v206
        %v212 = vmax.f32 %v202, %v208
        %vm213 = vcmask 1042432
        %v214 = vrot.slane %v167, 5
        %v215 = vrot.slane %v168, 5
        %v216 = vsel %vm213, %v214, %v215
        %v217 = vrot.slane %v169, 5
        %v218 = vsel %vm213, %v215, %v217
        %v221 = vmax.f32 %v211, %v216
        %v222 = vmax.f32 %v212, %v218
        %vm223 = vcmask 1041408
        %v224 = vrot.slane %v167, 6
        %v225 = vrot.slane %v168, 6
        %v226 = vsel %vm223, %v224, %v225
        %v227 = vrot.slane %v169, 6
        %v228 = vsel %vm223, %v225, %v227
        %v231 = vmax.f32 %v221, %v226
        %v232 = vmax.f32 %v222, %v228
        %235 = vrot.lane.b32.xlu0 %v231, 127
        %v236 = vpop.permute.xlu0 %235
        %237 = vrot.lane.b32.xlu0 %v232, 127
        %v238 = vpop.permute.xlu0 %237
        %v241 = vmax.f32 %v231, %v236
        %v242 = vmax.f32 %v232, %v238
        %243 = vrot.lane.b32.xlu0 %v231, 126
        %v244 = vpop.permute.xlu0 %243
        %245 = vrot.lane.b32.xlu0 %v232, 126
        %v246 = vpop.permute.xlu0 %245
        %v249 = vmax.f32 %v241, %v244
        %v250 = vmax.f32 %v242, %v246
        %251 = vrot.lane.b32.xlu0 %v231, 125
        %v252 = vpop.permute.xlu0 %251
        %253 = vrot.lane.b32.xlu0 %v232, 125
        %v254 = vpop.permute.xlu0 %253
        %v257 = vmax.f32 %v249, %v252
        %v258 = vmax.f32 %v250, %v254
        %259 = vrot.lane.b32.xlu0 %v231, 124
        %v260 = vpop.permute.xlu0 %259
        %261 = vrot.lane.b32.xlu0 %v232, 124
        %v262 = vpop.permute.xlu0 %261
        %v265 = vmax.f32 %v257, %v260
        %v266 = vmax.f32 %v258, %v262
        %267 = vrot.lane.b32.xlu0 %v231, 123
        %v268 = vpop.permute.xlu0 %267
        %269 = vrot.lane.b32.xlu0 %v232, 123
        %v270 = vpop.permute.xlu0 %269
        %v273 = vmax.f32 %v265, %v268
        %v274 = vmax.f32 %v266, %v270
        %275 = vrot.lane.b32.xlu0 %v231, 122
        %v276 = vpop.permute.xlu0 %275
        %277 = vrot.lane.b32.xlu0 %v232, 122
        %v278 = vpop.permute.xlu0 %277
        %v281 = vmax.f32 %v273, %v276
        %v282 = vmax.f32 %v274, %v278
        %vm283 = vcmp.eq.f32.partialorder %v149, %v281
        %vm284 = vcmp.eq.f32.partialorder %v150, %v282
        %v285 = vsel %vm283, %v149, 0.0
        %v286 = vsel %vm284, %v150, 0.0
        %vm287 = vcmask 130048
        %288 = vst.msk [vmem:[%s137] sm:$0xff] %vm287, %v285
        %289 = vst.msk [vmem:[%s137 + $0x8] sm:$0xff] %vm287, %v286
        %s290 = sand.u32 %s72, 1
        %s291 = scalar_lea.sflag [#allocation5], %s290
        %s292 = sand.u32 %s72, 1
        %s293 = smul.addr %s292, 16
        %s294 = scalar_lea.vmem [#allocation4], %s293
        // Predicated region
        $region29: #{harris_net_forward.3} parent=27 // pred_check
          %p295 = pneg %p82
        $region30: #{harris_net_forward.3} parent=27 // pred_check_branch
          %297 = sbr.rel (%p295) target = $region32
        $region31: #{harris_net_forward.3} parent=27 // pred_region
          %s299 = ssub.s32 256, 256
          %300 = vsyncadd %s291, %s299
          %s301 = smul.addr %s17, 2
          %s302 = smul.addr %s301, 128
          %s303 = scalar_lea.hbm %s2, %s302
          %s304 = sshll.u32 %s294, 4
          %s305 = int_to_ptr.vmem [resolvable:$true] %s304
          %310 = dma.vmem_to_hbm [thread:$0]  %s305, 256, %s303, %s291, 128, 128, 8
        $region32: #{harris_net_forward.3} parent=27 // pred_fallthru
          _
      $region28: #{harris_net_forward.3} parent=5 // pred_fallthru
        _
      %p311 = scmp.le.s32.totalorder 2, %s12
      // Predicated region
      $region33: #{harris_net_forward.3} parent=5 // pred_check
        %p312 = pneg %p311
      $region34: #{harris_net_forward.3} parent=5 // pred_check_branch
        %314 = sbr.rel (%p312) target = $region36
      $region35: #{harris_net_forward.3} parent=5 // pred_region
        %s315 = ssub.s32 %s12, 2
        // Predicated region
        $region37: #{harris_net_forward.3} parent=35 // pred_check
          %p316 = pneg %p88
        $region38: #{harris_net_forward.3} parent=35 // pred_check_branch
          %318 = sbr.rel (%p316) target = $region40
        $region39: #{harris_net_forward.3} parent=35 // pred_region
          %s319 = sand.u32 %s73, 1
          %s320 = scalar_lea.sflag [#allocation5], %s319
          %s321 = sand.u32 %s73, 1
          %s322 = smul.addr %s321, 16
          %s323 = scalar_lea.vmem [#allocation4], %s322
          %324 = dma.done %s320, 256
        $region40: #{harris_net_forward.3} parent=35 // pred_fallthru
          _
      $region36: #{harris_net_forward.3} parent=5 // pred_fallthru
        _
    $region6: #{harris_net_forward.3} parent=1 // loop_footer
      %s16 = sadd.s32 1, %s12
    $region7: #{harris_net_forward.3} parent=1 // loop_footer_branch
      %11 = sbr.rel target = $region3
    $region8: #{harris_net_forward.3} parent=1 // loop_exit
      _
    %325 = vsyncpa [#allocation5], 1
    %s326 = scalar_lea.sflag [#allocation5], 1
    %327 = vsyncpa %s326, 1

// kernel: harris_net_forward.2
$region0: #{harris_net_forward.2}
  #allocation0 [shape = 'u32[]', space=smem, size = 0x4, offset = 0x4, fixed_abs, tag = 'smem constant byte address 0x4 - core index']
  #allocation1 [shape = 'u32[144,128]{1,0:T(1,128)}', space=vmem, size = 0x12000, scoped, tag = 'internal scratch']
  %s0 = inlined_call_operand.hbm [shape: f32[2,16,16], index: 0, kind: input, shape index: {}]
  %s1 = inlined_call_operand.hbm [shape: f32[3,16,16], index: 1, kind: input, shape index: {}]
  %s2 = inlined_call_operand.hbm [shape: f32[3,16,16], index: 2, kind: input, shape index: {}]
  %s3 = inlined_call_operand.vmem [shape: f32[2,16,16], index: 3, kind: output, shape index: {}]
  %s4 = sld [smem:[#allocation0]]
  $region57: #{harris_net_forward.2} parent=0
    _
  %s6 = ssub.s32 1, %s4
  %s7 = scalar_select 0, %s6, %s4
  $region1: #{harris_net_forward.2} parent=0
    #allocation2 [shape = 'u8[16384]{0}', space=vmem, size = 0x4000, scoped, tag = 'input window, operand 0']
    #allocation3 [shape = 's32[2]{0}', space=sflag, size = 0x8, scoped, tag = 'scoped memory for harris_net_forward.2']
    #allocation4 [shape = 'u8[24576]{0}', space=vmem, size = 0x6000, scoped, tag = 'input window, operand 1, single buffered']
    #allocation5 [shape = 's32[1]{0}', space=sflag, size = 0x4, scoped, tag = 'scoped memory for harris_net_forward.2']
    #allocation6 [shape = 'u8[24576]{0}', space=vmem, size = 0x6000, scoped, tag = 'input window, operand 2, single buffered']
    %8 = vsyncpa [#allocation3], 0
    %s9 = scalar_lea.sflag [#allocation3], 1
    %10 = vsyncpa %s9, 0
    %11 = vsyncpa [#allocation5], 0
    loop: start=0, step=1, limit=4
    $region2: #{harris_net_forward.2} parent=1 // loop_pre_header
      _
    $region3: #{harris_net_forward.2} parent=1 // loop_header
      %s13 = sphi 0, %s17
      %p14 = scmp.ge.s32.totalorder %s13, 4
      %s23 = sphi 0, %s25
      %s26 = sphi 0, %s23
      %s27 = sphi 0, %s26
      %s43 = sphi 0, %s27
      %s47 = sphi 0, %s47
      %s49 = sphi 0, %s47
      %s50 = sphi 0, %s49
      %s64 = sphi 0, %s50
      %s68 = sphi 0, %s68
      %s70 = sphi 0, %s68
      %s71 = sphi 0, %s70
      %s85 = sphi 0, %s71
      %s91 = sphi 0, %s93
      %s94 = sphi 0, %s91
      %s95 = sphi 0, %s94
      %s111 = sphi 0, %s95
    $region4: #{harris_net_forward.2} parent=1 // loop_header_branch
      %16 = sbr.rel (%p14) target = $region8
    $region5: #{harris_net_forward.2} parent=1 // loop_body
      %s18 = ssub.s32 %s13, 1
      %s19 = ssub.s32 %s13, 2
      %s20 = sadd.s32 %s13, 1
      %s21 = ssub.s32 %s13, %s20
      %p22 = scmp.eq.s32.totalorder %s21, 0
      %s24 = sadd.s32 %s23, 1
      %s25 = scalar_select %p22, %s23, %s24
      %p28 = pneg %p22
      %p29 = scmp.eq.s32.totalorder %s13, 1
      %p30 = por %p28, %p29
      %p31 = scmp.ne.s32.totalorder %s23, %s26
      %p32 = scmp.eq.s32.totalorder %s13, 0
      %p33 = por %p31, %p32
      %p34 = scmp.ne.s32.totalorder %s23, %s26
      %p35 = scmp.eq.s32.totalorder %s18, 1
      %p36 = por %p34, %p35
      %p37 = scmp.ne.s32.totalorder %s26, %s27
      %p38 = scmp.eq.s32.totalorder %s18, 0
      %p39 = por %p37, %p38
      %p40 = scmp.ne.s32.totalorder %s26, %s27
      %p41 = scmp.eq.s32.totalorder %s19, 1
      %p42 = por %p40, %p41
      %p44 = scmp.ne.s32.totalorder %s27, %s43
      %p45 = scmp.eq.s32.totalorder %s19, 0
      %p46 = por %p44, %p45
      %s48 = sadd.s32 %s47, 1
      %p51 = scmp.eq.s32.totalorder %s13, 1
      %p52 = scmp.ne.s32.totalorder %s47, %s49
      %p53 = scmp.eq.s32.totalorder %s13, 0
      %p54 = por %p52, %p53
      %p55 = scmp.ne.s32.totalorder %s47, %s49
      %p56 = scmp.eq.s32.totalorder %s18, 1
      %p57 = por %p55, %p56
      %p58 = scmp.ne.s32.totalorder %s49, %s50
      %p59 = scmp.eq.s32.totalorder %s18, 0
      %p60 = por %p58, %p59
      %p61 = scmp.ne.s32.totalorder %s49, %s50
      %p62 = scmp.eq.s32.totalorder %s19, 1
      %p63 = por %p61, %p62
      %p65 = scmp.ne.s32.totalorder %s50, %s64
      %p66 = scmp.eq.s32.totalorder %s19, 0
      %p67 = por %p65, %p66
      %s69 = sadd.s32 %s68, 1
      %p72 = scmp.eq.s32.totalorder %s13, 1
      %p73 = scmp.ne.s32.totalorder %s68, %s70
      %p74 = scmp.eq.s32.totalorder %s13, 0
      %p75 = por %p73, %p74
      %p76 = scmp.ne.s32.totalorder %s68, %s70
      %p77 = scmp.eq.s32.totalorder %s18, 1
      %p78 = por %p76, %p77
      %p79 = scmp.ne.s32.totalorder %s70, %s71
      %p80 = scmp.eq.s32.totalorder %s18, 0
      %p81 = por %p79, %p80
      %p82 = scmp.ne.s32.totalorder %s70, %s71
      %p83 = scmp.eq.s32.totalorder %s19, 1
      %p84 = por %p82, %p83
      %p86 = scmp.ne.s32.totalorder %s71, %s85
      %p87 = scmp.eq.s32.totalorder %s19, 0
      %p88 = por %p86, %p87
      %s89 = ssub.s32 %s13, %s20
      %p90 = scmp.eq.s32.totalorder %s89, 0
      %s92 = sadd.s32 %s91, 1
      %s93 = scalar_select %p90, %s91, %s92
      %p96 = pneg %p90
      %p97 = scmp.eq.s32.totalorder %s13, 1
      %p98 = por %p96, %p97
      %p99 = scmp.ne.s32.totalorder %s91, %s94
      %p100 = scmp.eq.s32.totalorder %s13, 0
      %p101 = por %p99, %p100
      %p102 = scmp.ne.s32.totalorder %s91, %s94
      %p103 = scmp.eq.s32.totalorder %s18, 1
      %p104 = por %p102, %p103
      %p105 = scmp.ne.s32.totalorder %s94, %s95
      %p106 = scmp.eq.s32.totalorder %s18, 0
      %p107 = por %p105, %p106
      %p108 = scmp.ne.s32.totalorder %s94, %s95
      %p109 = scmp.eq.s32.totalorder %s19, 1
      %p110 = por %p108, %p109
      %p112 = scmp.ne.s32.totalorder %s95, %s111
      %p113 = scmp.eq.s32.totalorder %s19, 0
      %p114 = por %p112, %p113
      %p115 = scmp.le.s32.totalorder 1, %s13
      %p116 = scmp.lt.s32.totalorder %s13, 3
      %p117 = pnand %p115, %p116
      %p118 = pneg %p117
      // Predicated region
      $region9: #{harris_net_forward.2} parent=5 // pred_check
        _
      $region10: #{harris_net_forward.2} parent=5 // pred_check_branch
        %120 = sbr.rel (%p117) target = $region12
      $region11: #{harris_net_forward.2} parent=5 // pred_region
        %s121 = ssub.s32 %s13, 1
        // Predicated region
        $region13: #{harris_net_forward.2} parent=11 // pred_check
          %p122 = pneg %p60
        $region14: #{harris_net_forward.2} parent=11 // pred_check_branch
          %124 = sbr.rel (%p122) target = $region16
        $region15: #{harris_net_forward.2} parent=11 // pred_region
          %s126 = ssub.s32 768, 768
          %127 = vsyncadd [#allocation5], %s126
          %s128 = sshll.u32 [#allocation4], 4
          %s129 = int_to_ptr.vmem [resolvable:$true] %s128
          %134 = dma.hbm_to_vmem [thread:$0]  %s1, 768, %s129, [#allocation5], 128, 128, 8
        $region16: #{harris_net_forward.2} parent=11 // pred_fallthru
          _
        // Predicated region
        $region17: #{harris_net_forward.2} parent=11 // pred_check
          %p135 = pneg %p81
        $region18: #{harris_net_forward.2} parent=11 // pred_check_branch
          %137 = sbr.rel (%p135) target = $region20
        $region19: #{harris_net_forward.2} parent=11 // pred_region
          %s139 = ssub.s32 768, 768
          %140 = vsyncadd [#allocation5], %s139
          %s141 = sshll.u32 [#allocation6], 4
          %s142 = int_to_ptr.vmem [resolvable:$true] %s141
          %147 = dma.hbm_to_vmem [thread:$0]  %s2, 768, %s142, [#allocation5], 128, 128, 8
        $region20: #{harris_net_forward.2} parent=11 // pred_fallthru
          _
      $region12: #{harris_net_forward.2} parent=5 // pred_fallthru
        _
      %p148 = scmp.lt.s32.totalorder %s13, 2
      // Predicated region
      $region21: #{harris_net_forward.2} parent=5 // pred_check
        %p149 = pneg %p148
      $region22: #{harris_net_forward.2} parent=5 // pred_check_branch
        %151 = sbr.rel (%p149) target = $region24
      $region23: #{harris_net_forward.2} parent=5 // pred_region
        // Predicated region
        $region25: #{harris_net_forward.2} parent=23 // pred_check
          %p152 = pneg %p33
        $region26: #{harris_net_forward.2} parent=23 // pred_check_branch
          %154 = sbr.rel (%p152) target = $region28
        $region27: #{harris_net_forward.2} parent=23 // pred_region
          %s155 = sand.u32 %s23, 1
          %s156 = scalar_lea.sflag [#allocation3], %s155
          %s157 = sand.u32 %s23, 1
          %s158 = smul.addr %s157, 16
          %s159 = scalar_lea.vmem [#allocation2], %s158
          %s161 = ssub.s32 256, 256
          %162 = vsyncadd %s156, %s161
          %s163 = smul.addr %s13, 2
          %s164 = smul.addr %s163, 128
          %s165 = scalar_lea.hbm %s0, %s164
          %s166 = sshll.u32 %s159, 4
          %s167 = int_to_ptr.vmem [resolvable:$true] %s166
          %172 = dma.hbm_to_vmem [thread:$0]  %s165, 256, %s167, %s156, 128, 128, 8
        $region28: #{harris_net_forward.2} parent=23 // pred_fallthru
          _
      $region24: #{harris_net_forward.2} parent=5 // pred_fallthru
        _
      %p173 = scmp.le.s32.totalorder 1, %s13
      %p174 = scmp.lt.s32.totalorder %s13, 3
      %p175 = pnand %p173, %p174
      %p176 = pneg %p175
      // Predicated region
      $region29: #{harris_net_forward.2} parent=5 // pred_check
        _
      $region30: #{harris_net_forward.2} parent=5 // pred_check_branch
        %178 = sbr.rel (%p175) target = $region32
      $region31: #{harris_net_forward.2} parent=5 // pred_region
        %s179 = ssub.s32 %s13, 1
        %s180 = sand.u32 %s26, 1
        %s181 = scalar_lea.sflag [#allocation3], %s180
        %s182 = sand.u32 %s26, 1
        %s183 = smul.addr %s182, 16
        %s184 = scalar_lea.vmem [#allocation2], %s183
        // Predicated region
        $region33: #{harris_net_forward.2} parent=31 // pred_check
          %p185 = pneg %p39
        $region34: #{harris_net_forward.2} parent=31 // pred_check_branch
          %187 = sbr.rel (%p185) target = $region36
        $region35: #{harris_net_forward.2} parent=31 // pred_region
          %188 = dma.done %s181, 256
        $region36: #{harris_net_forward.2} parent=31 // pred_fallthru
          _
        // Predicated region
        $region37: #{harris_net_forward.2} parent=31 // pred_check
          %p189 = pneg %p60
        $region38: #{harris_net_forward.2} parent=31 // pred_check_branch
          %191 = sbr.rel (%p189) target = $region40
        $region39: #{harris_net_forward.2} parent=31 // pred_region
          %192 = dma.done [#allocation5], 768
        $region40: #{harris_net_forward.2} parent=31 // pred_fallthru
          _
        // Predicated region
        $region41: #{harris_net_forward.2} parent=31 // pred_check
          %p193 = pneg %p81
        $region42: #{harris_net_forward.2} parent=31 // pred_check_branch
          %195 = sbr.rel (%p193) target = $region44
        $region43: #{harris_net_forward.2} parent=31 // pred_region
          %196 = dma.done [#allocation5], 768
        $region44: #{harris_net_forward.2} parent=31 // pred_fallthru
          _
        %s197 = sand.u32 %s26, 1
        %s198 = scalar_lea.sflag [#allocation3], %s197
        %s199 = sand.u32 %s26, 1
        %s200 = smul.addr %s199, 16
        %s201 = scalar_lea.vmem [#allocation2], %s200
        %p202 = pneg %p39
        %p203 = pneg %p36
        %p204 = pneg %p60
        %p205 = pneg %p57
        %p206 = pneg %p81
        %p207 = pneg %p78
        %p208 = pneg %p107
        %p209 = pneg %p104
        %p210 = scmp.lt.s32.totalorder %s18, 1
        %s211 = scalar_select %p210, %s18, 1
        %s212 = smul.addr %s211, 2
        %s213 = smul.addr %s212, 8
        %s214 = scalar_lea.vmem %s3, %s213
        %p215 = scmp.lt.s32.totalorder %s18, 1
        %s216 = scalar_select %p215, %s18, 1
        %s217 = smul.addr %s216, 2
        %s218 = smul.addr %s217, 8
        %s219 = scalar_lea.vmem %s3, %s218
        %v220 = vld [vmem:[%s184] sm:$0xff]
        %v221 = vld [vmem:[%s184 + $0x8] sm:$0xff]
        %v222 = vld [vmem:[#allocation4] sm:$0xff]
        %v223 = vld [vmem:[#allocation4 + $0x8] sm:$0xff]
        %vm224 = vcmask 130048
        %v226 = vsel %vm224, %v222, 0
        %v229 = vsel %vm224, %v223, 0
        %231 = vmatprep.subr.mxu0 0.0
        %232 = vmatpush1.msra.mxu0 %v220
        %233 = vmatprep.subr.mxu0 0.0
        %234 = vmatpush1.msra.mxu0 %v221
        %235 = vmatprep.subr.mxu0 0.0
        %236 = vmatpush1.msra.mxu0 0.0
        %237 = vmatprep.subr.mxu0 0.0
        %238 = vmatpush1.msra.mxu0 0.0
        %239 = vmatprep.subr.mxu0 0.0
        %240 = vmatpush1.msra.mxu0 0.0
        %241 = vmatprep.subr.mxu0 0.0
        %242 = vmatpush1.msra.mxu0 0.0
        %243 = vmatprep.subr.mxu0 0.0
        %244 = vmatpush1.msra.mxu0 0.0
        %245 = vmatprep.subr.mxu0 0.0
        %246 = vmatpush1.msra.mxu0 0.0
        %247 = vmatprep.subr.mxu0 0.0
        %248 = vmatpush1.msra.mxu0 0.0
        %249 = vmatprep.subr.mxu0 0.0
        %250 = vmatpush1.msra.mxu0 0.0
        %251 = vmatprep.subr.mxu0 0.0
        %252 = vmatpush1.msra.mxu0 0.0
        %253 = vmatprep.subr.mxu0 0.0
        %254 = vmatpush1.msra.mxu0 0.0
        %255 = vmatprep.subr.mxu0 0.0
        %256 = vmatpush1.msra.mxu0 0.0
        %257 = vmatprep.subr.mxu0 0.0
        %258 = vmatpush1.msra.mxu0 0.0
        %259 = vmatprep.subr.mxu0 0.0
        %260 = vmatpush1.msra.mxu0 0.0
        %261 = vmatprep.subr.mxu0 0.0
        %262 = vmatpush1.msra.mxu0 0.0
        %263 = vmatprep.subr.mxu0 0.0
        %264 = vmatpush1.msra.mxu0 0.0
        %265 = vmatprep.subr.mxu0 0.0
        %266 = vmatpush1.msra.mxu0 0.0
        %267 = vmatprep.subr.mxu0 0.0
        %268 = vmatpush1.msra.mxu0 0.0
        %269 = vmatprep.subr.mxu0 0.0
        %270 = vmatpush1.msra.mxu0 0.0
        %271 = vmatprep.subr.mxu0 0.0
        %272 = vmatpush1.msra.mxu0 0.0
        %273 = vmatprep.subr.mxu0 0.0
        %274 = vmatpush1.msra.mxu0 0.0
        %275 = vmatprep.subr.mxu0 0.0
        %276 = vmatpush1.msra.mxu0 0.0
        %277 = vmatprep.subr.mxu0 0.0
        %278 = vmatpush1.msra.mxu0 0.0
        %279 = vmatprep.subr.mxu0 0.0
        %280 = vmatpush1.msra.mxu0 0.0
        %281 = vmatprep.subr.mxu0 0.0
        %282 = vmatpush1.msra.mxu0 0.0
        %283 = vmatprep.subr.mxu0 0.0
        %284 = vmatpush1.msra.mxu0 0.0
        %285 = vmatprep.subr.mxu0 0.0
        %286 = vmatpush1.msra.mxu0 0.0
        %287 = vmatprep.subr.mxu0 0.0
        %288 = vmatpush1.msra.mxu0 0.0
        %289 = vmatprep.subr.mxu0 0.0
        %290 = vmatpush1.msra.mxu0 0.0
        %291 = vmatprep.subr.mxu0 0.0
        %292 = vmatpush1.msra.mxu0 0.0
        %293 = vmatprep.subr.mxu0 0.0
        %294 = vmatpush1.msra.mxu0 0.0
        %295 = vmatprep.mubr.f32.mxu0 0.0
        %296 = vmatmul.mubr.f32.gmra.mrb[0].mxu0 %v226
        %v297 = vpop.f32.mrb[0].mxu0
        %v298 = vadd.f32 0.0, %v297
        %v299 = vpop.f32.mrb[0].mxu0
        %300 = vmatprep.mubr.f32.mxu0 0.0
        %301 = vmatmul.mubr.f32.gmra.mrb[0].mxu0 %v229
        %v302 = vpop.f32.mrb[0].mxu0
        %v303 = vadd.f32 0.0, %v302
        %v304 = vpop.f32.mrb[0].mxu0
        %305 = vdwg.mxu0
        %v306 = vld [vmem:[#allocation6] sm:$0xff]
        %v307 = vld [vmem:[#allocation6 + $0x8] sm:$0xff]
        %v309 = vsel %vm224, %v298, 0
        %v312 = vsel %vm224, %v303, 0
        %314 = vmatprep.subr.mxu0 0.0
        %315 = vmatpush1.msra.mxu0 %v306
        %316 = vmatprep.subr.mxu0 0.0
        %317 = vmatpush1.msra.mxu0 %v307
        %318 = vmatprep.subr.mxu0 0.0
        %319 = vmatpush1.msra.mxu0 0.0
        %320 = vmatprep.subr.mxu0 0.0
        %321 = vmatpush1.msra.mxu0 0.0
        %322 = vmatprep.subr.mxu0 0.0
        %323 = vmatpush1.msra.mxu0 0.0
        %324 = vmatprep.subr.mxu0 0.0
        %325 = vmatpush1.msra.mxu0 0.0
        %326 = vmatprep.subr.mxu0 0.0
        %327 = vmatpush1.msra.mxu0 0.0
        %328 = vmatprep.subr.mxu0 0.0
        %329 = vmatpush1.msra.mxu0 0.0
        %330 = vmatprep.subr.mxu0 0.0
        %331 = vmatpush1.msra.mxu0 0.0
        %332 = vmatprep.subr.mxu0 0.0
        %333 = vmatpush1.msra.mxu0 0.0
        %334 = vmatprep.subr.mxu0 0.0
        %335 = vmatpush1.msra.mxu0 0.0
        %336 = vmatprep.subr.mxu0 0.0
        %337 = vmatpush1.msra.mxu0 0.0
        %338 = vmatprep.subr.mxu0 0.0
        %339 = vmatpush1.msra.mxu0 0.0
        %340 = vmatprep.subr.mxu0 0.0
        %341 = vmatpush1.msra.mxu0 0.0
        %342 = vmatprep.subr.mxu0 0.0
        %343 = vmatpush1.msra.mxu0 0.0
        %344 = vmatprep.subr.mxu0 0.0
        %345 = vmatpush1.msra.mxu0 0.0
        %346 = vmatprep.subr.mxu0 0.0
        %347 = vmatpush1.msra.mxu0 0.0
        %348 = vmatprep.subr.mxu0 0.0
        %349 = vmatpush1.msra.mxu0 0.0
        %350 = vmatprep.subr.mxu0 0.0
        %351 = vmatpush1.msra.mxu0 0.0
        %352 = vmatprep.subr.mxu0 0.0
        %353 = vmatpush1.msra.mxu0 0.0
        %354 = vmatprep.subr.mxu0 0.0
        %355 = vmatpush1.msra.mxu0 0.0
        %356 = vmatprep.subr.mxu0 0.0
        %357 = vmatpush1.msra.mxu0 0.0
        %358 = vmatprep.subr.mxu0 0.0
        %359 = vmatpush1.msra.mxu0 0.0
        %360 = vmatprep.subr.mxu0 0.0
        %361 = vmatpush1.msra.mxu0 0.0
        %362 = vmatprep.subr.mxu0 0.0
        %363 = vmatpush1.msra.mxu0 0.0
        %364 = vmatprep.subr.mxu0 0.0
        %365 = vmatpush1.msra.mxu0 0.0
        %366 = vmatprep.subr.mxu0 0.0
        %367 = vmatpush1.msra.mxu0 0.0
        %368 = vmatprep.subr.mxu0 0.0
        %369 = vmatpush1.msra.mxu0 0.0
        %370 = vmatprep.subr.mxu0 0.0
        %371 = vmatpush1.msra.mxu0 0.0
        %372 = vmatprep.subr.mxu0 0.0
        %373 = vmatpush1.msra.mxu0 0.0
        %374 = vmatprep.subr.mxu0 0.0
        %375 = vmatpush1.msra.mxu0 0.0
        %376 = vmatprep.subr.mxu0 0.0
        %377 = vmatpush1.msra.mxu0 0.0
        %378 = vmatprep.mubr.f32.mxu0 0.0
        %379 = vmatmul.mubr.f32.gmra.mrb[0].mxu0 %v309
        %v380 = vpop.f32.mrb[0].mxu0
        %v381 = vadd.f32 0.0, %v380
        %v382 = vpop.f32.mrb[0].mxu0
        %383 = vmatprep.mubr.f32.mxu0 0.0
        %384 = vmatmul.mubr.f32.gmra.mrb[0].mxu0 %v312
        %v385 = vpop.f32.mrb[0].mxu0
        %v386 = vadd.f32 0.0, %v385
        %v387 = vpop.f32.mrb[0].mxu0
        %388 = vdwg.mxu0
        %s389 = scalar_lea.vmem [#allocation4], 16
        %v390 = vld [vmem:[%s389] sm:$0xff]
        %v391 = vld [vmem:[%s389 + $0x8] sm:$0xff]
        %v393 = vsel %vm224, %v390, 0
        %v396 = vsel %vm224, %v391, 0
        %398 = vmatprep.subr.mxu0 0.0
        %399 = vmatpush1.msra.mxu0 %v220
        %400 = vmatprep.subr.mxu0 0.0
        %401 = vmatpush1.msra.mxu0 %v221
        %402 = vmatprep.subr.mxu0 0.0
        %403 = vmatpush1.msra.mxu0 0.0
        %404 = vmatprep.subr.mxu0 0.0
        %405 = vmatpush1.msra.mxu0 0.0
        %406 = vmatprep.subr.mxu0 0.0
        %407 = vmatpush1.msra.mxu0 0.0
        %408 = vmatprep.subr.mxu0 0.0
        %409 = vmatpush1.msra.mxu0 0.0
        %410 = vmatprep.subr.mxu0 0.0
        %411 = vmatpush1.msra.mxu0 0.0
        %412 = vmatprep.subr.mxu0 0.0
        %413 = vmatpush1.msra.mxu0 0.0
        %414 = vmatprep.subr.mxu0 0.0
        %415 = vmatpush1.msra.mxu0 0.0
        %416 = vmatprep.subr.mxu0 0.0
        %417 = vmatpush1.msra.mxu0 0.0
        %418 = vmatprep.subr.mxu0 0.0
        %419 = vmatpush1.msra.mxu0 0.0
        %420 = vmatprep.subr.mxu0 0.0
        %421 = vmatpush1.msra.mxu0 0.0
        %422 = vmatprep.subr.mxu0 0.0
        %423 = vmatpush1.msra.mxu0 0.0
        %424 = vmatprep.subr.mxu0 0.0
        %425 = vmatpush1.msra.mxu0 0.0
        %426 = vmatprep.subr.mxu0 0.0
        %427 = vmatpush1.msra.mxu0 0.0
        %428 = vmatprep.subr.mxu0 0.0
        %429 = vmatpush1.msra.mxu0 0.0
        %430 = vmatprep.subr.mxu0 0.0
        %431 = vmatpush1.msra.mxu0 0.0
        %432 = vmatprep.subr.mxu0 0.0
        %433 = vmatpush1.msra.mxu0 0.0
        %434 = vmatprep.subr.mxu0 0.0
        %435 = vmatpush1.msra.mxu0 0.0
        %436 = vmatprep.subr.mxu0 0.0
        %437 = vmatpush1.msra.mxu0 0.0
        %438 = vmatprep.subr.mxu0 0.0
        %439 = vmatpush1.msra.mxu0 0.0
        %440 = vmatprep.subr.mxu0 0.0
        %441 = vmatpush1.msra.mxu0 0.0
        %442 = vmatprep.subr.mxu0 0.0
        %443 = vmatpush1.msra.mxu0 0.0
        %444 = vmatprep.subr.mxu0 0.0
        %445 = vmatpush1.msra.mxu0 0.0
        %446 = vmatprep.subr.mxu0 0.0
        %447 = vmatpush1.msra.mxu0 0.0
        %448 = vmatprep.subr.mxu0 0.0
        %449 = vmatpush1.msra.mxu0 0.0
        %450 = vmatprep.subr.mxu0 0.0
        %451 = vmatpush1.msra.mxu0 0.0
        %452 = vmatprep.subr.mxu0 0.0
        %453 = vmatpush1.msra.mxu0 0.0
        %454 = vmatprep.subr.mxu0 0.0
        %455 = vmatpush1.msra.mxu0 0.0
        %456 = vmatprep.subr.mxu0 0.0
        %457 = vmatpush1.msra.mxu0 0.0
        %458 = vmatprep.subr.mxu0 0.0
        %459 = vmatpush1.msra.mxu0 0.0
        %460 = vmatprep.subr.mxu0 0.0
        %461 = vmatpush1.msra.mxu0 0.0
        %462 = vmatprep.mubr.f32.mxu0 0.0
        %463 = vmatmul.mubr.f32.gmra.mrb[0].mxu0 %v393
        %v464 = vpop.f32.mrb[0].mxu0
        %v465 = vadd.f32 0.0, %v464
        %v466 = vpop.f32.mrb[0].mxu0
        %467 = vmatprep.mubr.f32.mxu0 0.0
        %468 = vmatmul.mubr.f32.gmra.mrb[0].mxu0 %v396
        %v469 = vpop.f32.mrb[0].mxu0
        %v470 = vadd.f32 0.0, %v469
        %v471 = vpop.f32.mrb[0].mxu0
        %472 = vdwg.mxu0
        %s473 = scalar_lea.vmem [#allocation6], 16
        %v474 = vld [vmem:[%s473] sm:$0xff]
        %v475 = vld [vmem:[%s473 + $0x8] sm:$0xff]
        %v477 = vsel %vm224, %v465, 0
        %v480 = vsel %vm224, %v470, 0
        %482 = vmatprep.subr.mxu0 0.0
        %483 = vmatpush1.msra.mxu0 %v474
        %484 = vmatprep.subr.mxu0 0.0
        %485 = vmatpush1.msra.mxu0 %v475
        %486 = vmatprep.subr.mxu0 0.0
        %487 = vmatpush1.msra.mxu0 0.0
        %488 = vmatprep.subr.mxu0 0.0
        %489 = vmatpush1.msra.mxu0 0.0
        %490 = vmatprep.subr.mxu0 0.0
        %491 = vmatpush1.msra.mxu0 0.0
        %492 = vmatprep.subr.mxu0 0.0
        %493 = vmatpush1.msra.mxu0 0.0
        %494 = vmatprep.subr.mxu0 0.0
        %495 = vmatpush1.msra.mxu0 0.0
        %496 = vmatprep.subr.mxu0 0.0
        %497 = vmatpush1.msra.mxu0 0.0
        %498 = vmatprep.subr.mxu0 0.0
        %499 = vmatpush1.msra.mxu0 0.0
        %500 = vmatprep.subr.mxu0 0.0
        %501 = vmatpush1.msra.mxu0 0.0
        %502 = vmatprep.subr.mxu0 0.0
        %503 = vmatpush1.msra.mxu0 0.0
        %504 = vmatprep.subr.mxu0 0.0
        %505 = vmatpush1.msra.mxu0 0.0
        %506 = vmatprep.subr.mxu0 0.0
        %507 = vmatpush1.msra.mxu0 0.0
        %508 = vmatprep.subr.mxu0 0.0
        %509 = vmatpush1.msra.mxu0 0.0
        %510 = vmatprep.subr.mxu0 0.0
        %511 = vmatpush1.msra.mxu0 0.0
        %512 = vmatprep.subr.mxu0 0.0
        %513 = vmatpush1.msra.mxu0 0.0
        %514 = vmatprep.subr.mxu0 0.0
        %515 = vmatpush1.msra.mxu0 0.0
        %516 = vmatprep.subr.mxu0 0.0
        %517 = vmatpush1.msra.mxu0 0.0
        %518 = vmatprep.subr.mxu0 0.0
        %519 = vmatpush1.msra.mxu0 0.0
        %520 = vmatprep.subr.mxu0 0.0
        %521 = vmatpush1.msra.mxu0 0.0
        %522 = vmatprep.subr.mxu0 0.0
        %523 = vmatpush1.msra.mxu0 0.0
        %524 = vmatprep.subr.mxu0 0.0
        %525 = vmatpush1.msra.mxu0 0.0
        %526 = vmatprep.subr.mxu0 0.0
        %527 = vmatpush1.msra.mxu0 0.0
        %528 = vmatprep.subr.mxu0 0.0
        %529 = vmatpush1.msra.mxu0 0.0
        %530 = vmatprep.subr.mxu0 0.0
        %531 = vmatpush1.msra.mxu0 0.0
        %532 = vmatprep.subr.mxu0 0.0
        %533 = vmatpush1.msra.mxu0 0.0
        %534 = vmatprep.subr.mxu0 0.0
        %535 = vmatpush1.msra.mxu0 0.0
        %536 = vmatprep.subr.mxu0 0.0
        %537 = vmatpush1.msra.mxu0 0.0
        %538 = vmatprep.subr.mxu0 0.0
        %539 = vmatpush1.msra.mxu0 0.0
        %540 = vmatprep.subr.mxu0 0.0
        %541 = vmatpush1.msra.mxu0 0.0
        %542 = vmatprep.subr.mxu0 0.0
        %543 = vmatpush1.msra.mxu0 0.0
        %544 = vmatprep.subr.mxu0 0.0
        %545 = vmatpush1.msra.mxu0 0.0
        %546 = vmatprep.mubr.f32.mxu0 0.0
        %547 = vmatmul.mubr.f32.gmra.mrb[0].mxu0 %v477
        %v548 = vpop.f32.mrb[0].mxu0
        %v549 = vadd.f32 0.0, %v548
        %v550 = vpop.f32.mrb[0].mxu0
        %551 = vmatprep.mubr.f32.mxu0 0.0
        %552 = vmatmul.mubr.f32.gmra.mrb[0].mxu0 %v480
        %v553 = vpop.f32.mrb[0].mxu0
        %v554 = vadd.f32 0.0, %v553
        %v555 = vpop.f32.mrb[0].mxu0
        %556 = vdwg.mxu0
        %v557 = vmul.f32 %v381, %v381
        %v558 = vmul.f32 %v386, %v386
        %v559 = vmul.f32 %v549, %v549
        %v560 = vmul.f32 %v554, %v554
        %v561 = vmul.f32 %v381, %v549
        %v562 = vmul.f32 %v386, %v554
        %s563 = scalar_lea.vmem [#allocation4], 32
        %v564 = vld [vmem:[%s563] sm:$0xff]
        %v565 = vld [vmem:[%s563 + $0x8] sm:$0xff]
        %s566 = scalar_lea.vmem [#allocation6], 32
        %v567 = vld [vmem:[%s566] sm:$0xff]
        %v568 = vld [vmem:[%s566 + $0x8] sm:$0xff]
        %v570 = vsel %vm224, %v564, 0
        %v573 = vsel %vm224, %v565, 0
        %575 = vmatprep.subr.mxu0 0.0
        %576 = vmatpush1.msra.mxu0 %v557
        %577 = vmatprep.subr.mxu0 0.0
        %578 = vmatpush1.msra.mxu0 %v558
        %579 = vmatprep.subr.mxu0 0.0
        %580 = vmatpush1.msra.mxu0 0.0
        %581 = vmatprep.subr.mxu0 0.0
        %582 = vmatpush1.msra.mxu0 0.0
        %583 = vmatprep.subr.mxu0 0.0
        %584 = vmatpush1.msra.mxu0 0.0
        %585 = vmatprep.subr.mxu0 0.0
        %586 = vmatpush1.msra.mxu0 0.0
        %587 = vmatprep.subr.mxu0 0.0
        %588 = vmatpush1.msra.mxu0 0.0
        %589 = vmatprep.subr.mxu0 0.0
        %590 = vmatpush1.msra.mxu0 0.0
        %591 = vmatprep.subr.mxu0 0.0
        %592 = vmatpush1.msra.mxu0 0.0
        %593 = vmatprep.subr.mxu0 0.0
        %594 = vmatpush1.msra.mxu0 0.0
        %595 = vmatprep.subr.mxu0 0.0
        %596 = vmatpush1.msra.mxu0 0.0
        %597 = vmatprep.subr.mxu0 0.0
        %598 = vmatpush1.msra.mxu0 0.0
        %599 = vmatprep.subr.mxu0 0.0
        %600 = vmatpush1.msra.mxu0 0.0
        %601 = vmatprep.subr.mxu0 0.0
        %602 = vmatpush1.msra.mxu0 0.0
        %603 = vmatprep.subr.mxu0 0.0
        %604 = vmatpush1.msra.mxu0 0.0
        %605 = vmatprep.subr.mxu0 0.0
        %606 = vmatpush1.msra.mxu0 0.0
        %607 = vmatprep.subr.mxu0 0.0
        %608 = vmatpush1.msra.mxu0 0.0
        %609 = vmatprep.subr.mxu0 0.0
        %610 = vmatpush1.msra.mxu0 0.0
        %611 = vmatprep.subr.mxu0 0.0
        %612 = vmatpush1.msra.mxu0 0.0
        %613 = vmatprep.subr.mxu0 0.0
        %614 = vmatpush1.msra.mxu0 0.0
        %615 = vmatprep.subr.mxu0 0.0
        %616 = vmatpush1.msra.mxu0 0.0
        %617 = vmatprep.subr.mxu0 0.0
        %618 = vmatpush1.msra.mxu0 0.0
        %619 = vmatprep.subr.mxu0 0.0
        %620 = vmatpush1.msra.mxu0 0.0
        %621 = vmatprep.subr.mxu0 0.0
        %622 = vmatpush1.msra.mxu0 0.0
        %623 = vmatprep.subr.mxu0 0.0
        %624 = vmatpush1.msra.mxu0 0.0
        %625 = vmatprep.subr.mxu0 0.0
        %626 = vmatpush1.msra.mxu0 0.0
        %627 = vmatprep.subr.mxu0 0.0
        %628 = vmatpush1.msra.mxu0 0.0
        %629 = vmatprep.subr.mxu0 0.0
        %630 = vmatpush1.msra.mxu0 0.0
        %631 = vmatprep.subr.mxu0 0.0
        %632 = vmatpush1.msra.mxu0 0.0
        %633 = vmatprep.subr.mxu0 0.0
        %634 = vmatpush1.msra.mxu0 0.0
        %635 = vmatprep.subr.mxu0 0.0
        %636 = vmatpush1.msra.mxu0 0.0
        %637 = vmatprep.subr.mxu0 0.0
        %638 = vmatpush1.msra.mxu0 0.0
        %639 = vmatprep.mubr.f32.mxu0 0.0
        %640 = vmatmul.mubr.f32.gmra.mrb[0].mxu0 %v570
        %v641 = vpop.f32.mrb[0].mxu0
        %v642 = vadd.f32 0.0, %v641
        %v643 = vpop.f32.mrb[0].mxu0
        %644 = vmatprep.mubr.f32.mxu0 0.0
        %645 = vmatmul.mubr.f32.gmra.mrb[0].mxu0 %v573
        %v646 = vpop.f32.mrb[0].mxu0
        %v647 = vadd.f32 0.0, %v646
        %v648 = vpop.f32.mrb[0].mxu0
        %649 = vdwg.mxu0
        %v651 = vsel %vm224, %v642, 0
        %v654 = vsel %vm224, %v647, 0
        %656 = vmatprep.subr.mxu0 0.0
        %657 = vmatpush1.msra.mxu0 %v567
        %658 = vmatprep.subr.mxu0 0.0
        %659 = vmatpush1.msra.mxu0 %v568
        %660 = vmatprep.subr.mxu0 0.0
        %661 = vmatpush1.msra.mxu0 0.0
        %662 = vmatprep.subr.mxu0 0.0
        %663 = vmatpush1.msra.mxu0 0.0
        %664 = vmatprep.subr.mxu0 0.0
        %665 = vmatpush1.msra.mxu0 0.0
        %666 = vmatprep.subr.mxu0 0.0
        %667 = vmatpush1.msra.mxu0 0.0
        %668 = vmatprep.subr.mxu0 0.0
        %669 = vmatpush1.msra.mxu0 0.0
        %670 = vmatprep.subr.mxu0 0.0
        %671 = vmatpush1.msra.mxu0 0.0
        %672 = vmatprep.subr.mxu0 0.0
        %673 = vmatpush1.msra.mxu0 0.0
        %674 = vmatprep.subr.mxu0 0.0
        %675 = vmatpush1.msra.mxu0 0.0
        %676 = vmatprep.subr.mxu0 0.0
        %677 = vmatpush1.msra.mxu0 0.0
        %678 = vmatprep.subr.mxu0 0.0
        %679 = vmatpush1.msra.mxu0 0.0
        %680 = vmatprep.subr.mxu0 0.0
        %681 = vmatpush1.msra.mxu0 0.0
        %682 = vmatprep.subr.mxu0 0.0
        %683 = vmatpush1.msra.mxu0 0.0
        %684 = vmatprep.subr.mxu0 0.0
        %685 = vmatpush1.msra.mxu0 0.0
        %686 = vmatprep.subr.mxu0 0.0
        %687 = vmatpush1.msra.mxu0 0.0
        %688 = vmatprep.subr.mxu0 0.0
        %689 = vmatpush1.msra.mxu0 0.0
        %690 = vmatprep.subr.mxu0 0.0
        %691 = vmatpush1.msra.mxu0 0.0
        %692 = vmatprep.subr.mxu0 0.0
        %693 = vmatpush1.msra.mxu0 0.0
        %694 = vmatprep.subr.mxu0 0.0
        %695 = vmatpush1.msra.mxu0 0.0
        %696 = vmatprep.subr.mxu0 0.0
        %697 = vmatpush1.msra.mxu0 0.0
        %698 = vmatprep.subr.mxu0 0.0
        %699 = vmatpush1.msra.mxu0 0.0
        %700 = vmatprep.subr.mxu0 0.0
        %701 = vmatpush1.msra.mxu0 0.0
        %702 = vmatprep.subr.mxu0 0.0
        %703 = vmatpush1.msra.mxu0 0.0
        %704 = vmatprep.subr.mxu0 0.0
        %705 = vmatpush1.msra.mxu0 0.0
        %706 = vmatprep.subr.mxu0 0.0
        %707 = vmatpush1.msra.mxu0 0.0
        %708 = vmatprep.subr.mxu0 0.0
        %709 = vmatpush1.msra.mxu0 0.0
        %710 = vmatprep.subr.mxu0 0.0
        %711 = vmatpush1.msra.mxu0 0.0
        %712 = vmatprep.subr.mxu0 0.0
        %713 = vmatpush1.msra.mxu0 0.0
        %714 = vmatprep.subr.mxu0 0.0
        %715 = vmatpush1.msra.mxu0 0.0
        %716 = vmatprep.subr.mxu0 0.0
        %717 = vmatpush1.msra.mxu0 0.0
        %718 = vmatprep.subr.mxu0 0.0
        %719 = vmatpush1.msra.mxu0 0.0
        %720 = vmatprep.mubr.f32.mxu0 0.0
        %721 = vmatmul.mubr.f32.gmra.mrb[0].mxu0 %v651
        %v722 = vpop.f32.mrb[0].mxu0
        %v723 = vadd.f32 0.0, %v722
        %v724 = vpop.f32.mrb[0].mxu0
        %725 = vmatprep.mubr.f32.mxu0 0.0
        %726 = vmatmul.mubr.f32.gmra.mrb[0].mxu0 %v654
        %v727 = vpop.f32.mrb[0].mxu0
        %v728 = vadd.f32 0.0, %v727
        %v729 = vpop.f32.mrb[0].mxu0
        %730 = vdwg.mxu0
        %731 = vmatprep.subr.mxu0 0.0
        %732 = vmatpush1.msra.mxu0 %v559
        %733 = vmatprep.subr.mxu0 0.0
        %734 = vmatpush1.msra.mxu0 %v560
        %735 = vmatprep.subr.mxu0 0.0
        %736 = vmatpush1.msra.mxu0 0.0
        %737 = vmatprep.subr.mxu0 0.0
        %738 = vmatpush1.msra.mxu0 0.0
        %739 = vmatprep.subr.mxu0 0.0
        %740 = vmatpush1.msra.mxu0 0.0
        %741 = vmatprep.subr.mxu0 0.0
        %742 = vmatpush1.msra.mxu0 0.0
        %743 = vmatprep.subr.mxu0 0.0
        %744 = vmatpush1.msra.mxu0 0.0
        %745 = vmatprep.subr.mxu0 0.0
        %746 = vmatpush1.msra.mxu0 0.0
        %747 = vmatprep.subr.mxu0 0.0
        %748 = vmatpush1.msra.mxu0 0.0
        %749 = vmatprep.subr.mxu0 0.0
        %750 = vmatpush1.msra.mxu0 0.0
        %751 = vmatprep.subr.mxu0 0.0
        %752 = vmatpush1.msra.mxu0 0.0
        %753 = vmatprep.subr.mxu0 0.0
        %754 = vmatpush1.msra.mxu0 0.0
        %755 = vmatprep.subr.mxu0 0.0
        %756 = vmatpush1.msra.mxu0 0.0
        %757 = vmatprep.subr.mxu0 0.0
        %758 = vmatpush1.msra.mxu0 0.0
        %759 = vmatprep.subr.mxu0 0.0
        %760 = vmatpush1.msra.mxu0 0.0
        %761 = vmatprep.subr.mxu0 0.0
        %762 = vmatpush1.msra.mxu0 0.0
        %763 = vmatprep.subr.mxu0 0.0
        %764 = vmatpush1.msra.mxu0 0.0
        %765 = vmatprep.subr.mxu0 0.0
        %766 = vmatpush1.msra.mxu0 0.0
        %767 = vmatprep.subr.mxu0 0.0
        %768 = vmatpush1.msra.mxu0 0.0
        %769 = vmatprep.subr.mxu0 0.0
        %770 = vmatpush1.msra.mxu0 0.0
        %771 = vmatprep.subr.mxu0 0.0
        %772 = vmatpush1.msra.mxu0 0.0
        %773 = vmatprep.subr.mxu0 0.0
        %774 = vmatpush1.msra.mxu0 0.0
        %775 = vmatprep.subr.mxu0 0.0
        %776 = vmatpush1.msra.mxu0 0.0
        %777 = vmatprep.subr.mxu0 0.0
        %778 = vmatpush1.msra.mxu0 0.0
        %779 = vmatprep.subr.mxu0 0.0
        %780 = vmatpush1.msra.mxu0 0.0
        %781 = vmatprep.subr.mxu0 0.0
        %782 = vmatpush1.msra.mxu0 0.0
        %783 = vmatprep.subr.mxu0 0.0
        %784 = vmatpush1.msra.mxu0 0.0
        %785 = vmatprep.subr.mxu0 0.0
        %786 = vmatpush1.msra.mxu0 0.0
        %787 = vmatprep.subr.mxu0 0.0
        %788 = vmatpush1.msra.mxu0 0.0
        %789 = vmatprep.subr.mxu0 0.0
        %790 = vmatpush1.msra.mxu0 0.0
        %791 = vmatprep.subr.mxu0 0.0
        %792 = vmatpush1.msra.mxu0 0.0
        %793 = vmatprep.subr.mxu0 0.0
        %794 = vmatpush1.msra.mxu0 0.0
        %795 = vmatprep.mubr.f32.mxu0 0.0
        %796 = vmatmul.mubr.f32.gmra.mrb[0].mxu0 %v570
        %v797 = vpop.f32.mrb[0].mxu0
        %v798 = vadd.f32 0.0, %v797
        %v799 = vpop.f32.mrb[0].mxu0
        %800 = vmatprep.mubr.f32.mxu0 0.0
        %801 = vmatmul.mubr.f32.gmra.mrb[0].mxu0 %v573
        %v802 = vpop.f32.mrb[0].mxu0
        %v803 = vadd.f32 0.0, %v802
        %v804 = vpop.f32.mrb[0].mxu0
        %805 = vdwg.mxu0
        %v807 = vsel %vm224, %v798, 0
        %v810 = vsel %vm224, %v803, 0
        %812 = vmatprep.subr.mxu0 0.0
        %813 = vmatpush1.msra.mxu0 %v567
        %814 = vmatprep.subr.mxu0 0.0
        %815 = vmatpush1.msra.mxu0 %v568
        %816 = vmatprep.subr.mxu0 0.0
        %817 = vmatpush1.msra.mxu0 0.0
        %818 = vmatprep.subr.mxu0 0.0
        %819 = vmatpush1.msra.mxu0 0.0
        %820 = vmatprep.subr.mxu0 0.0
        %821 = vmatpush1.msra.mxu0 0.0
        %822 = vmatprep.subr.mxu0 0.0
        %823 = vmatpush1.msra.mxu0 0.0
        %824 = vmatprep.subr.mxu0 0.0
        %825 = vmatpush1.msra.mxu0 0.0
        %826 = vmatprep.subr.mxu0 0.0
        %827 = vmatpush1.msra.mxu0 0.0
        %828 = vmatprep.subr.mxu0 0.0
        %829 = vmatpush1.msra.mxu0 0.0
        %830 = vmatprep.subr.mxu0 0.0
        %831 = vmatpush1.msra.mxu0 0.0
        %832 = vmatprep.subr.mxu0 0.0
        %833 = vmatpush1.msra.mxu0 0.0
        %834 = vmatprep.subr.mxu0 0.0
        %835 = vmatpush1.msra.mxu0 0.0
        %836 = vmatprep.subr.mxu0 0.0
        %837 = vmatpush1.msra.mxu0 0.0
        %838 = vmatprep.subr.mxu0 0.0
        %839 = vmatpush1.msra.mxu0 0.0
        %840 = vmatprep.subr.mxu0 0.0
        %841 = vmatpush1.msra.mxu0 0.0
        %842 = vmatprep.subr.mxu0 0.0
        %843 = vmatpush1.msra.mxu0 0.0
        %844 = vmatprep.subr.mxu0 0.0
        %845 = vmatpush1.msra.mxu0 0.0
        %846 = vmatprep.subr.mxu0 0.0
        %847 = vmatpush1.msra.mxu0 0.0
        %848 = vmatprep.subr.mxu0 0.0
        %849 = vmatpush1.msra.mxu0 0.0
        %850 = vmatprep.subr.mxu0 0.0
        %851 = vmatpush1.msra.mxu0 0.0
        %852 = vmatprep.subr.mxu0 0.0
        %853 = vmatpush1.msra.mxu0 0.0
        %854 = vmatprep.subr.mxu0 0.0
        %855 = vmatpush1.msra.mxu0 0.0
        %856 = vmatprep.subr.mxu0 0.0
        %857 = vmatpush1.msra.mxu0 0.0
        %858 = vmatprep.subr.mxu0 0.0
        %859 = vmatpush1.msra.mxu0 0.0
        %860 = vmatprep.subr.mxu0 0.0
        %861 = vmatpush1.msra.mxu0 0.0
        %862 = vmatprep.subr.mxu0 0.0
        %863 = vmatpush1.msra.mxu0 0.0
        %864 = vmatprep.subr.mxu0 0.0
        %865 = vmatpush1.msra.mxu0 0.0
        %866 = vmatprep.subr.mxu0 0.0
        %867 = vmatpush1.msra.mxu0 0.0
        %868 = vmatprep.subr.mxu0 0.0
        %869 = vmatpush1.msra.mxu0 0.0
        %870 = vmatprep.subr.mxu0 0.0
        %871 = vmatpush1.msra.mxu0 0.0
        %872 = vmatprep.subr.mxu0 0.0
        %873 = vmatpush1.msra.mxu0 0.0
        %874 = vmatprep.subr.mxu0 0.0
        %875 = vmatpush1.msra.mxu0 0.0
        %876 = vmatprep.mubr.f32.mxu0 0.0
        %877 = vmatmul.mubr.f32.gmra.mrb[0].mxu0 %v807
        %v878 = vpop.f32.mrb[0].mxu0
        %v879 = vadd.f32 0.0, %v878
        %v880 = vpop.f32.mrb[0].mxu0
        %881 = vmatprep.mubr.f32.mxu0 0.0
        %882 = vmatmul.mubr.f32.gmra.mrb[0].mxu0 %v810
        %v883 = vpop.f32.mrb[0].mxu0
        %v884 = vadd.f32 0.0, %v883
        %v885 = vpop.f32.mrb[0].mxu0
        %886 = vdwg.mxu0
        %887 = vmatprep.subr.mxu0 0.0
        %888 = vmatpush1.msra.mxu0 %v561
        %889 = vmatprep.subr.mxu0 0.0
        %890 = vmatpush1.msra.mxu0 %v562
        %891 = vmatprep.subr.mxu0 0.0
        %892 = vmatpush1.msra.mxu0 0.0
        %893 = vmatprep.subr.mxu0 0.0
        %894 = vmatpush1.msra.mxu0 0.0
        %895 = vmatprep.subr.mxu0 0.0
        %896 = vmatpush1.msra.mxu0 0.0
        %897 = vmatprep.subr.mxu0 0.0
        %898 = vmatpush1.msra.mxu0 0.0
        %899 = vmatprep.subr.mxu0 0.0
        %900 = vmatpush1.msra.mxu0 0.0
        %901 = vmatprep.subr.mxu0 0.0
        %902 = vmatpush1.msra.mxu0 0.0
        %903 = vmatprep.subr.mxu0 0.0
        %904 = vmatpush1.msra.mxu0 0.0
        %905 = vmatprep.subr.mxu0 0.0
        %906 = vmatpush1.msra.mxu0 0.0
        %907 = vmatprep.subr.mxu0 0.0
        %908 = vmatpush1.msra.mxu0 0.0
        %909 = vmatprep.subr.mxu0 0.0
        %910 = vmatpush1.msra.mxu0 0.0
        %911 = vmatprep.subr.mxu0 0.0
        %912 = vmatpush1.msra.mxu0 0.0
        %913 = vmatprep.subr.mxu0 0.0
        %914 = vmatpush1.msra.mxu0 0.0
        %915 = vmatprep.subr.mxu0 0.0
        %916 = vmatpush1.msra.mxu0 0.0
        %917 = vmatprep.subr.mxu0 0.0
        %918 = vmatpush1.msra.mxu0 0.0
        %919 = vmatprep.subr.mxu0 0.0
        %920 = vmatpush1.msra.mxu0 0.0
        %921 = vmatprep.subr.mxu0 0.0
        %922 = vmatpush1.msra.mxu0 0.0
        %923 = vmatprep.subr.mxu0 0.0
        %924 = vmatpush1.msra.mxu0 0.0
        %925 = vmatprep.subr.mxu0 0.0
        %926 = vmatpush1.msra.mxu0 0.0
        %927 = vmatprep.subr.mxu0 0.0
        %928 = vmatpush1.msra.mxu0 0.0
        %929 = vmatprep.subr.mxu0 0.0
        %930 = vmatpush1.msra.mxu0 0.0
        %931 = vmatprep.subr.mxu0 0.0
        %932 = vmatpush1.msra.mxu0 0.0
        %933 = vmatprep.subr.mxu0 0.0
        %934 = vmatpush1.msra.mxu0 0.0
        %935 = vmatprep.subr.mxu0 0.0
        %936 = vmatpush1.msra.mxu0 0.0
        %937 = vmatprep.subr.mxu0 0.0
        %938 = vmatpush1.msra.mxu0 0.0
        %939 = vmatprep.subr.mxu0 0.0
        %940 = vmatpush1.msra.mxu0 0.0
        %941 = vmatprep.subr.mxu0 0.0
        %942 = vmatpush1.msra.mxu0 0.0
        %943 = vmatprep.subr.mxu0 0.0
        %944 = vmatpush1.msra.mxu0 0.0
        %945 = vmatprep.subr.mxu0 0.0
        %946 = vmatpush1.msra.mxu0 0.0
        %947 = vmatprep.subr.mxu0 0.0
        %948 = vmatpush1.msra.mxu0 0.0
        %949 = vmatprep.subr.mxu0 0.0
        %950 = vmatpush1.msra.mxu0 0.0
        %951 = vmatprep.mubr.f32.mxu0 0.0
        %952 = vmatmul.mubr.f32.gmra.mrb[0].mxu0 %v570
        %v953 = vpop.f32.mrb[0].mxu0
        %v954 = vadd.f32 0.0, %v953
        %v955 = vpop.f32.mrb[0].mxu0
        %956 = vmatprep.mubr.f32.mxu0 0.0
        %957 = vmatmul.mubr.f32.gmra.mrb[0].mxu0 %v573
        %v958 = vpop.f32.mrb[0].mxu0
        %v959 = vadd.f32 0.0, %v958
        %v960 = vpop.f32.mrb[0].mxu0
        %961 = vdwg.mxu0
        %v963 = vsel %vm224, %v954, 0
        %v966 = vsel %vm224, %v959, 0
        %968 = vmatprep.subr.mxu0 0.0
        %969 = vmatpush1.msra.mxu0 %v567
        %970 = vmatprep.subr.mxu0 0.0
        %971 = vmatpush1.msra.mxu0 %v568
        %972 = vmatprep.subr.mxu0 0.0
        %973 = vmatpush1.msra.mxu0 0.0
        %974 = vmatprep.subr.mxu0 0.0
        %975 = vmatpush1.msra.mxu0 0.0
        %976 = vmatprep.subr.mxu0 0.0
        %977 = vmatpush1.msra.mxu0 0.0
        %978 = vmatprep.subr.mxu0 0.0
        %979 = vmatpush1.msra.mxu0 0.0
        %980 = vmatprep.subr.mxu0 0.0
        %981 = vmatpush1.msra.mxu0 0.0
        %982 = vmatprep.subr.mxu0 0.0
        %983 = vmatpush1.msra.mxu0 0.0
        %984 = vmatprep.subr.mxu0 0.0
        %985 = vmatpush1.msra.mxu0 0.0
        %986 = vmatprep.subr.mxu0 0.0
        %987 = vmatpush1.msra.mxu0 0.0
        %988 = vmatprep.subr.mxu0 0.0
        %989 = vmatpush1.msra.mxu0 0.0
        %990 = vmatprep.subr.mxu0 0.0
        %991 = vmatpush1.msra.mxu0 0.0
        %992 = vmatprep.subr.mxu0 0.0
        %993 = vmatpush1.msra.mxu0 0.0
        %994 = vmatprep.subr.mxu0 0.0
        %995 = vmatpush1.msra.mxu0 0.0
        %996 = vmatprep.subr.mxu0 0.0
        %997 = vmatpush1.msra.mxu0 0.0
        %998 = vmatprep.subr.mxu0 0.0
        %999 = vmatpush1.msra.mxu0 0.0
        %1000 = vmatprep.subr.mxu0 0.0
        %1001 = vmatpush1.msra.mxu0 0.0
        %1002 = vmatprep.subr.mxu0 0.0
        %1003 = vmatpush1.msra.mxu0 0.0
        %1004 = vmatprep.subr.mxu0 0.0
        %1005 = vmatpush1.msra.mxu0 0.0
        %1006 = vmatprep.subr.mxu0 0.0
        %1007 = vmatpush1.msra.mxu0 0.0
        %1008 = vmatprep.subr.mxu0 0.0
        %1009 = vmatpush1.msra.mxu0 0.0
        %1010 = vmatprep.subr.mxu0 0.0
        %1011 = vmatpush1.msra.mxu0 0.0
        %1012 = vmatprep.subr.mxu0 0.0
        %1013 = vmatpush1.msra.mxu0 0.0
        %1014 = vmatprep.subr.mxu0 0.0
        %1015 = vmatpush1.msra.mxu0 0.0
        %1016 = vmatprep.subr.mxu0 0.0
        %1017 = vmatpush1.msra.mxu0 0.0
        %1018 = vmatprep.subr.mxu0 0.0
        %1019 = vmatpush1.msra.mxu0 0.0
        %1020 = vmatprep.subr.mxu0 0.0
        %1021 = vmatpush1.msra.mxu0 0.0
        %1022 = vmatprep.subr.mxu0 0.0
        %1023 = vmatpush1.msra.mxu0 0.0
        %1024 = vmatprep.subr.mxu0 0.0
        %1025 = vmatpush1.msra.mxu0 0.0
        %1026 = vmatprep.subr.mxu0 0.0
        %1027 = vmatpush1.msra.mxu0 0.0
        %1028 = vmatprep.subr.mxu0 0.0
        %1029 = vmatpush1.msra.mxu0 0.0
        %1030 = vmatprep.subr.mxu0 0.0
        %1031 = vmatpush1.msra.mxu0 0.0
        %1032 = vmatprep.mubr.f32.mxu0 0.0
        %1033 = vmatmul.mubr.f32.gmra.mrb[0].mxu0 %v963
        %v1034 = vpop.f32.mrb[0].mxu0
        %v1035 = vadd.f32 0.0, %v1034
        %v1036 = vpop.f32.mrb[0].mxu0
        %1037 = vmatprep.mubr.f32.mxu0 0.0
        %1038 = vmatmul.mubr.f32.gmra.mrb[0].mxu0 %v966
        %v1039 = vpop.f32.mrb[0].mxu0
        %v1040 = vadd.f32 0.0, %v1039
        %v1041 = vpop.f32.mrb[0].mxu0
        %1042 = vdwg.mxu0
        %v1043 = vmul.f32 %v723, %v879
        %v1044 = vmul.f32 %v728, %v884
        %v1045 = vmul.f32 %v1035, %v1035
        %v1046 = vmul.f32 %v1040, %v1040
        %v1047 = vsub.f32 %v1043, %v1045
        %v1048 = vsub.f32 %v1044, %v1046
        %v1049 = vadd.f32 %v723, %v879
        %v1050 = vadd.f32 %v728, %v884
        %v1051 = vmul.f32 %v1049, %v1049
        %v1052 = vmul.f32 %v1050, %v1050
        %v1053 = vmul.f32 %v1051, 0.05
        %v1054 = vmul.f32 %v1052, 0.05
        %v1055 = vsub.f32 %v1047, %v1053
        %v1056 = vsub.f32 %v1048, %v1054
        %1057 = vst.msk [vmem:[%s219] sm:$0xff] %vm224, %v1055
        %1058 = vst.msk [vmem:[%s219 + $0x8] sm:$0xff] %vm224, %v1056
        %p1059 = scmp.lt.s32.totalorder %s18, 1
        %s1060 = scalar_select %p1059, %s18, 1
        %s1061 = smul.addr %s1060, 2
        %s1062 = smul.addr %s1061, 8
        %s1063 = scalar_lea.vmem %s3, %s1062
        // Predicated region
        $region45: #{harris_net_forward.2} parent=31 // pred_check
          %p1064 = pneg %p104
        $region46: #{harris_net_forward.2} parent=31 // pred_check_branch
          %1066 = sbr.rel (%p1064) target = $region48
        $region47: #{harris_net_forward.2} parent=31 // pred_region
          _
        $region48: #{harris_net_forward.2} parent=31 // pred_fallthru
          _
      $region32: #{harris_net_forward.2} parent=5 // pred_fallthru
        _
      %p1067 = scmp.le.s32.totalorder 2, %s13
      // Predicated region
      $region49: #{harris_net_forward.2} parent=5 // pred_check
        %p1068 = pneg %p1067
      $region50: #{harris_net_forward.2} parent=5 // pred_check_branch
        %1070 = sbr.rel (%p1068) target = $region52
      $region51: #{harris_net_forward.2} parent=5 // pred_region
        %s1071 = ssub.s32 %s13, 2
        // Predicated region
        $region53: #{harris_net_forward.2} parent=51 // pred_check
          %p1072 = pneg %p110
        $region54: #{harris_net_forward.2} parent=51 // pred_check_branch
          %1074 = sbr.rel (%p1072) target = $region56
        $region55: #{harris_net_forward.2} parent=51 // pred_region
          %p1075 = scmp.lt.s32.totalorder %s19, 1
          %s1076 = scalar_select %p1075, %s19, 1
          %s1077 = smul.addr %s1076, 2
          %s1078 = smul.addr %s1077, 8
          %s1079 = scalar_lea.vmem %s3, %s1078
        $region56: #{harris_net_forward.2} parent=51 // pred_fallthru
          _
      $region52: #{harris_net_forward.2} parent=5 // pred_fallthru
        _
    $region6: #{harris_net_forward.2} parent=1 // loop_footer
      %s17 = sadd.s32 1, %s13
    $region7: #{harris_net_forward.2} parent=1 // loop_footer_branch
      %12 = sbr.rel target = $region3
    $region8: #{harris_net_forward.2} parent=1 // loop_exit
      _
    %1080 = vsyncpa [#allocation3], 1
    %s1081 = scalar_lea.sflag [#allocation3], 1
    %1082 = vsyncpa %s1081, 1
    %1083 = vsyncpa [#allocation5], 1

</llo_original>
